<compile_context>
chip_gen: v6e
topology: v6e:2x2x1
jax: 0.10.0
libtpu: 0.0.40
codegen_flags: <defaults>
</compile_context>

<pallas_src>
import jax
import jax.numpy as jnp
from jax.experimental import pallas as pl
from jax.experimental.pallas import tpu as pltpu


def _mlp_kernel(x_ref, w1_ref, b1_ref, w2_ref, b2_ref, w3_ref, b3_ref, o_ref):
    # Layer 1: Linear (bf16 MXU operands, f32 accumulation) + bias + ReLU (f32)
    h = jnp.dot(x_ref[...].astype(jnp.bfloat16), w1_ref[...],
                preferred_element_type=jnp.float32)
    h = jnp.maximum(h + b1_ref[...], 0.0)
    # Layer 2
    h = jnp.dot(h.astype(jnp.bfloat16), w2_ref[...],
                preferred_element_type=jnp.float32)
    h = jnp.maximum(h + b2_ref[...], 0.0)
    # Layer 3
    h = jnp.dot(h.astype(jnp.bfloat16), w3_ref[...],
                preferred_element_type=jnp.float32)
    h = jnp.maximum(h + b3_ref[...], 0.0)
    o_ref[...] = h.astype(o_ref.dtype)


def _round_up(x: int, m: int) -> int:
    return ((x + m - 1) // m) * m


def text_encoder_forward(x, params, *, tile_b=256):
    """x: (B, D_in) float32. params: w1..w3 as (in, out), b1..b3 as (1, out), f32."""
    B, d_in = x.shape
    # bf16 MXU operands: cast weights once here (halves their DMA + VMEM).
    # Biases stay f32 so bias + ReLU run in f32.
    w1 = params["w1"].astype(jnp.bfloat16)
    w2 = params["w2"].astype(jnp.bfloat16)
    w3 = params["w3"].astype(jnp.bfloat16)
    b1, b2, b3 = params["b1"], params["b2"], params["b3"]
    d_out = w3.shape[1]

    # Batch tile: keep it >= 128 rows for the MXU (and a multiple of 8 for the
    # sublane dim), capped at tile_b. Pad the batch to a whole number of tiles.
    tb = min(tile_b, _round_up(max(B, 128), 8))
    grid_b = pl.cdiv(B, tb)
    b_pad = grid_b * tb
    if b_pad != B:
        x = jnp.pad(x, ((0, b_pad - B), (0, 0)))

    # Constant-index operands: whole array resident in VMEM (single copy,
    # no per-step streaming).
    resident = pl.BlockSpec(memory_space=pltpu.MemorySpace.VMEM)

    out = pl.pallas_call(
        _mlp_kernel,
        out_shape=jax.ShapeDtypeStruct((b_pad, d_out), x.dtype),
        grid=(grid_b,),
        in_specs=[
            pl.BlockSpec((tb, d_in), lambda i: (i, 0)),   # x tile (streamed)
            resident, resident,                           # w1, b1
            resident, resident,                           # w2, b2
            resident, resident,                           # w3, b3
        ],
        out_specs=pl.BlockSpec((tb, d_out), lambda i: (i, 0)),
        compiler_params=pltpu.CompilerParams(
            dimension_semantics=("parallel",),
        ),
    )(x, w1, b1, w2, b2, w3, b3)
    return out[:B]


def init_params(key, input_dim, hidden_dim, output_dim):
    """Deterministic init; weights stored as (in, out) == PyTorch Linear weight.T."""
    dim_list = [input_dim] + list(hidden_dim) + [output_dim]
    params = {}
    for idx, (din, dout) in enumerate(zip(dim_list[:-1], dim_list[1:]), start=1):
        key, kw, kb = jax.random.split(key, 3)
        bound = 1.0 / float(din) ** 0.5  # mimic nn.Linear default uniform init scale
        params[f"w{idx}"] = jax.random.uniform(
            kw, (din, dout), jnp.float32, -bound, bound)
        params[f"b{idx}"] = jax.random.uniform(
            kb, (1, dout), jnp.float32, -bound, bound)
    return params


def reference_forward(x, params):
    """Pure-JAX reference mirroring the kernel numerics (bf16 operands, f32 accum)."""
    h = x
    for i in (1, 2, 3):
        w = params[f"w{i}"].astype(jnp.bfloat16)
        h = jnp.dot(h.astype(jnp.bfloat16), w, preferred_element_type=jnp.float32)
        h = jnp.maximum(h + params[f"b{i}"], 0.0)
    return h


if __name__ == "__main__":
    # Small shapes consistent with the module: TextEncoder(input_dim, hidden, output_dim).
    # batch=384 is not a multiple of the 256-row tile -> exercises the padding
    # path and yields a 2-step grid (both v7x TensorCores get work).
    batch = 384
    input_dim, hidden_dim, output_dim = 128, [256, 128], 256

    key = jax.random.PRNGKey(0)
    key, kx = jax.random.split(key)
    x = jax.random.normal(kx, (batch, input_dim), jnp.float32)

    params = init_params(key, input_dim, hidden_dim, output_dim)

    out = text_encoder_forward(x, params, tile_b=256)
    out = jax.block_until_ready(out)

    ref = reference_forward(x, params)
    assert out.shape == (batch, output_dim), out.shape
    max_err = float(jnp.max(jnp.abs(out - ref)))
    assert jnp.allclose(out, ref, atol=1e-3, rtol=1e-3), f"mismatch vs reference: {max_err}"

    print("KERNEL_OK")
</pallas_src>

<mosaic_0001>
module attributes {stable_mosaic.version = 11 : i64} {
  func.func @_mlp_kernel(%arg0: i32, %arg1: memref<256x128xf32, #tpu.memory_space<vmem>>, %arg2: memref<128x256xbf16, #tpu.memory_space<vmem>>, %arg3: memref<1x256xf32, #tpu.memory_space<vmem>>, %arg4: memref<256x128xbf16, #tpu.memory_space<vmem>>, %arg5: memref<1x128xf32, #tpu.memory_space<vmem>>, %arg6: memref<128x256xbf16, #tpu.memory_space<vmem>>, %arg7: memref<1x256xf32, #tpu.memory_space<vmem>>, %arg8: memref<256x256xf32, #tpu.memory_space<vmem>>) attributes {dimension_semantics = [#tpu.dimension_semantics<parallel>], iteration_bounds = array<i64: 2>, scalar_prefetch = 0 : i64, scratch_operands = 0 : i64, tpu.core_type = #tpu.core_type<tc>, window_params = [{transform_indices = @transform_0, window_bounds = array<i64: 256, 128>}, {pipeline_mode = #tpu.pipeline_mode<synchronous>, transform_indices = @transform_1, window_bounds = array<i64: 128, 256>}, {pipeline_mode = #tpu.pipeline_mode<synchronous>, transform_indices = @transform_2, window_bounds = array<i64: 1, 256>}, {pipeline_mode = #tpu.pipeline_mode<synchronous>, transform_indices = @transform_3, window_bounds = array<i64: 256, 128>}, {pipeline_mode = #tpu.pipeline_mode<synchronous>, transform_indices = @transform_4, window_bounds = array<i64: 1, 128>}, {pipeline_mode = #tpu.pipeline_mode<synchronous>, transform_indices = @transform_5, window_bounds = array<i64: 128, 256>}, {pipeline_mode = #tpu.pipeline_mode<synchronous>, transform_indices = @transform_6, window_bounds = array<i64: 1, 256>}, {transform_indices = @transform_7, window_bounds = array<i64: 256, 256>}]} {
    %c0 = arith.constant 0 : index
    %c0_0 = arith.constant 0 : index
    %0 = vector.load %arg1[%c0, %c0_0] : memref<256x128xf32, #tpu.memory_space<vmem>>, vector<256x128xf32>
    %1 = arith.truncf %0 : vector<256x128xf32> to vector<256x128xbf16>
    %c0_1 = arith.constant 0 : index
    %c0_2 = arith.constant 0 : index
    %2 = vector.load %arg2[%c0_1, %c0_2] : memref<128x256xbf16, #tpu.memory_space<vmem>>, vector<128x256xbf16>
    %cst = arith.constant dense<0.000000e+00> : vector<256x256xf32>
    %3 = tpu.matmul %1, %2, %cst {dimension_numbers = #tpu.dot_dimension_numbers<[1], [0], [0], [1], [0, 0, 1, 1], [], []>} : vector<256x128xbf16>, vector<128x256xbf16>, vector<256x256xf32> -> vector<256x256xf32>
    %c0_3 = arith.constant 0 : index
    %c0_4 = arith.constant 0 : index
    %4 = vector.load %arg3[%c0_3, %c0_4] : memref<1x256xf32, #tpu.memory_space<vmem>>, vector<1x256xf32>
    %5 = vector.broadcast %4 : vector<1x256xf32> to vector<256x256xf32>
    %6 = arith.addf %3, %5 : vector<256x256xf32>
    %cst_5 = arith.constant 0.000000e+00 : f32
    %7 = vector.broadcast %cst_5 : f32 to vector<256x256xf32>
    %8 = arith.maximumf %6, %7 : vector<256x256xf32>
    %9 = arith.truncf %8 : vector<256x256xf32> to vector<256x256xbf16>
    %c0_6 = arith.constant 0 : index
    %c0_7 = arith.constant 0 : index
    %10 = vector.load %arg4[%c0_6, %c0_7] : memref<256x128xbf16, #tpu.memory_space<vmem>>, vector<256x128xbf16>
    %cst_8 = arith.constant dense<0.000000e+00> : vector<256x128xf32>
    %11 = tpu.matmul %9, %10, %cst_8 {dimension_numbers = #tpu.dot_dimension_numbers<[1], [0], [0], [1], [0, 0, 1, 1], [], []>} : vector<256x256xbf16>, vector<256x128xbf16>, vector<256x128xf32> -> vector<256x128xf32>
    %c0_9 = arith.constant 0 : index
    %c0_10 = arith.constant 0 : index
    %12 = vector.load %arg5[%c0_9, %c0_10] : memref<1x128xf32, #tpu.memory_space<vmem>>, vector<1x128xf32>
    %13 = vector.broadcast %12 : vector<1x128xf32> to vector<256x128xf32>
    %14 = arith.addf %11, %13 : vector<256x128xf32>
    %cst_11 = arith.constant 0.000000e+00 : f32
    %15 = vector.broadcast %cst_11 : f32 to vector<256x128xf32>
    %16 = arith.maximumf %14, %15 : vector<256x128xf32>
    %17 = arith.truncf %16 : vector<256x128xf32> to vector<256x128xbf16>
    %c0_12 = arith.constant 0 : index
    %c0_13 = arith.constant 0 : index
    %18 = vector.load %arg6[%c0_12, %c0_13] : memref<128x256xbf16, #tpu.memory_space<vmem>>, vector<128x256xbf16>
    %cst_14 = arith.constant dense<0.000000e+00> : vector<256x256xf32>
    %19 = tpu.matmul %17, %18, %cst_14 {dimension_numbers = #tpu.dot_dimension_numbers<[1], [0], [0], [1], [0, 0, 1, 1], [], []>} : vector<256x128xbf16>, vector<128x256xbf16>, vector<256x256xf32> -> vector<256x256xf32>
    %c0_15 = arith.constant 0 : index
    %c0_16 = arith.constant 0 : index
    %20 = vector.load %arg7[%c0_15, %c0_16] : memref<1x256xf32, #tpu.memory_space<vmem>>, vector<1x256xf32>
    %21 = vector.broadcast %20 : vector<1x256xf32> to vector<256x256xf32>
    %22 = arith.addf %19, %21 : vector<256x256xf32>
    %cst_17 = arith.constant 0.000000e+00 : f32
    %23 = vector.broadcast %cst_17 : f32 to vector<256x256xf32>
    %24 = arith.maximumf %22, %23 : vector<256x256xf32>
    %c0_18 = arith.constant 0 : index
    %c0_19 = arith.constant 0 : index
    %25 = vector.load %arg8[%c0_18, %c0_19] : memref<256x256xf32, #tpu.memory_space<vmem>>, vector<256x256xf32>
    tpu.vector_store %arg8[%c0_18, %c0_19], %24 {strides = array<i32>} : memref<256x256xf32, #tpu.memory_space<vmem>>, vector<256x256xf32>,
    return
  }
  func.func @transform_0(%arg0: i32) -> (i32, i32) {
    %c0_i32 = arith.constant 0 : i32
    %c0_i32_0 = arith.constant 0 : i32
    return %arg0, %c0_i32 : i32, i32
  }
  func.func @transform_1(%arg0: i32) -> (i32, i32) {
    %c0_i32 = arith.constant 0 : i32
    %c0_i32_0 = arith.constant 0 : i32
    %c0_i32_1 = arith.constant 0 : i32
    return %c0_i32, %c0_i32_0 : i32, i32
  }
  func.func @transform_2(%arg0: i32) -> (i32, i32) {
    %c0_i32 = arith.constant 0 : i32
    %c0_i32_0 = arith.constant 0 : i32
    %c0_i32_1 = arith.constant 0 : i32
    return %c0_i32, %c0_i32_0 : i32, i32
  }
  func.func @transform_3(%arg0: i32) -> (i32, i32) {
    %c0_i32 = arith.constant 0 : i32
    %c0_i32_0 = arith.constant 0 : i32
    %c0_i32_1 = arith.constant 0 : i32
    return %c0_i32, %c0_i32_0 : i32, i32
  }
  func.func @transform_4(%arg0: i32) -> (i32, i32) {
    %c0_i32 = arith.constant 0 : i32
    %c0_i32_0 = arith.constant 0 : i32
    %c0_i32_1 = arith.constant 0 : i32
    return %c0_i32, %c0_i32_0 : i32, i32
  }
  func.func @transform_5(%arg0: i32) -> (i32, i32) {
    %c0_i32 = arith.constant 0 : i32
    %c0_i32_0 = arith.constant 0 : i32
    %c0_i32_1 = arith.constant 0 : i32
    return %c0_i32, %c0_i32_0 : i32, i32
  }
  func.func @transform_6(%arg0: i32) -> (i32, i32) {
    %c0_i32 = arith.constant 0 : i32
    %c0_i32_0 = arith.constant 0 : i32
    %c0_i32_1 = arith.constant 0 : i32
    return %c0_i32, %c0_i32_0 : i32, i32
  }
  func.func @transform_7(%arg0: i32) -> (i32, i32) {
    %c0_i32 = arith.constant 0 : i32
    %c0_i32_0 = arith.constant 0 : i32
    return %arg0, %c0_i32 : i32, i32
  }
}

</mosaic_0001>

<llo_original>
// kernel: tpu_custom_call.1
$region0: #{tpu_custom_call.1}
  #allocation0 [shape = 'u32[]', space=smem, size = 0x4, offset = 0x4, fixed_abs, tag = 'smem constant byte address 0x4 - core index']
  #allocation1 [shape = 'u32[144,128]{1,0:T(1,128)}', space=vmem, size = 0x12000, scoped, tag = 'internal scratch']
  %s0 = inlined_call_operand.hbm [shape: f32[512,128], index: 0, kind: input, shape index: {}]
  %s1 = inlined_call_operand.hbm [shape: bf16[128,256], index: 1, kind: input, shape index: {}]
  %s2 = inlined_call_operand.vmem [shape: f32[1,256], index: 2, kind: input, shape index: {}]
  %s3 = inlined_call_operand.hbm [shape: bf16[256,128], index: 3, kind: input, shape index: {}]
  %s4 = inlined_call_operand.vmem [shape: f32[1,128], index: 4, kind: input, shape index: {}]
  %s5 = inlined_call_operand.hbm [shape: bf16[128,256], index: 5, kind: input, shape index: {}]
  %s6 = inlined_call_operand.vmem [shape: f32[1,256], index: 6, kind: input, shape index: {}]
  %s7 = inlined_call_operand.hbm [shape: f32[512,256], index: 7, kind: output, shape index: {}]
  %s8 = sld [smem:[#allocation0]]
  $region77: #{tpu_custom_call.1} parent=0
    _
  %s10 = ssub.s32 1, %s8
  %s11 = scalar_select 0, %s10, %s8
  $region1: #{tpu_custom_call.1} parent=0
    #allocation2 [shape = 'u8[262144]{0}', space=vmem, size = 0x40000, scoped, tag = 'input window, operand 0']
    #allocation3 [shape = 's32[2]{0}', space=sflag, size = 0x8, scoped, tag = 'scoped memory for tpu_custom_call.1']
    #allocation4 [shape = 's32[2]{0}', space=sflag, size = 0x8, scoped, tag = 'scoped memory for tpu_custom_call.1']
    #allocation5 [shape = 'u8[65536]{0}', space=vmem, size = 0x10000, scoped, tag = 'input window, operand 1, single buffered']
    #allocation6 [shape = 's32[1]{0}', space=sflag, size = 0x4, scoped, tag = 'scoped memory for tpu_custom_call.1']
    #allocation7 [shape = 'u8[65536]{0}', space=vmem, size = 0x10000, scoped, tag = 'input window, operand 3, single buffered']
    #allocation8 [shape = 'u8[65536]{0}', space=vmem, size = 0x10000, scoped, tag = 'input window, operand 5, single buffered']
    #allocation9 [shape = 's32[1]{0}', space=sflag, size = 0x4, scoped, tag = 'scoped memory for tpu_custom_call.1']
    #allocation10 [shape = 'u8[524288]{0}', space=vmem, size = 0x80000, scoped, tag = 'output window, operand 0']
    %12 = vsyncpa [#allocation3], 0
    %s13 = scalar_lea.sflag [#allocation3], 1
    %14 = vsyncpa %s13, 0
    %15 = vsyncpa [#allocation6], 0
    %16 = vsyncpa [#allocation9], 0
    %17 = vsyncpa [#allocation4], 0
    %s18 = scalar_lea.sflag [#allocation4], 1
    %19 = vsyncpa %s18, 0
    loop: start=0, step=1, limit=4
    $region2: #{tpu_custom_call.1} parent=1 // loop_pre_header
      _
    $region3: #{tpu_custom_call.1} parent=1 // loop_header
      %s21 = sphi 0, %s25
      %p22 = scmp.ge.s32.totalorder %s21, 4
      %s31 = sphi 0, %s33
      %s34 = sphi 0, %s31
      %s35 = sphi 0, %s34
      %s51 = sphi 0, %s35
      %s55 = sphi 0, %s55
      %s57 = sphi 0, %s55
      %s58 = sphi 0, %s57
      %s72 = sphi 0, %s58
      %s76 = sphi 0, %s76
      %s78 = sphi 0, %s76
      %s79 = sphi 0, %s78
      %s93 = sphi 0, %s79
      %s97 = sphi 0, %s97
      %s99 = sphi 0, %s97
      %s100 = sphi 0, %s99
      %s114 = sphi 0, %s100
      %s118 = sphi 0, %s118
      %s120 = sphi 0, %s118
      %s121 = sphi 0, %s120
      %s135 = sphi 0, %s121
      %s139 = sphi 0, %s139
      %s141 = sphi 0, %s139
      %s142 = sphi 0, %s141
      %s156 = sphi 0, %s142
      %s160 = sphi 0, %s160
      %s162 = sphi 0, %s160
      %s163 = sphi 0, %s162
      %s177 = sphi 0, %s163
      %s183 = sphi 0, %s185
      %s186 = sphi 0, %s183
      %s187 = sphi 0, %s186
      %s203 = sphi 0, %s187
    $region4: #{tpu_custom_call.1} parent=1 // loop_header_branch
      %24 = sbr.rel (%p22) target = $region8
    $region5: #{tpu_custom_call.1} parent=1 // loop_body
      %s26 = ssub.s32 %s21, 1
      %s27 = ssub.s32 %s21, 2
      %s28 = sadd.s32 %s21, 1
      %s29 = ssub.s32 %s21, %s28
      %p30 = scmp.eq.s32.totalorder %s29, 0
      %s32 = sadd.s32 %s31, 1
      %s33 = scalar_select %p30, %s31, %s32
      %p36 = pneg %p30
      %p37 = scmp.eq.s32.totalorder %s21, 1
      %p38 = por %p36, %p37
      %p39 = scmp.ne.s32.totalorder %s31, %s34
      %p40 = scmp.eq.s32.totalorder %s21, 0
      %p41 = por %p39, %p40
      %p42 = scmp.ne.s32.totalorder %s31, %s34
      %p43 = scmp.eq.s32.totalorder %s26, 1
      %p44 = por %p42, %p43
      %p45 = scmp.ne.s32.totalorder %s34, %s35
      %p46 = scmp.eq.s32.totalorder %s26, 0
      %p47 = por %p45, %p46
      %p48 = scmp.ne.s32.totalorder %s34, %s35
      %p49 = scmp.eq.s32.totalorder %s27, 1
      %p50 = por %p48, %p49
      %p52 = scmp.ne.s32.totalorder %s35, %s51
      %p53 = scmp.eq.s32.totalorder %s27, 0
      %p54 = por %p52, %p53
      %s56 = sadd.s32 %s55, 1
      %p59 = scmp.eq.s32.totalorder %s21, 1
      %p60 = scmp.ne.s32.totalorder %s55, %s57
      %p61 = scmp.eq.s32.totalorder %s21, 0
      %p62 = por %p60, %p61
      %p63 = scmp.ne.s32.totalorder %s55, %s57
      %p64 = scmp.eq.s32.totalorder %s26, 1
      %p65 = por %p63, %p64
      %p66 = scmp.ne.s32.totalorder %s57, %s58
      %p67 = scmp.eq.s32.totalorder %s26, 0
      %p68 = por %p66, %p67
      %p69 = scmp.ne.s32.totalorder %s57, %s58
      %p70 = scmp.eq.s32.totalorder %s27, 1
      %p71 = por %p69, %p70
      %p73 = scmp.ne.s32.totalorder %s58, %s72
      %p74 = scmp.eq.s32.totalorder %s27, 0
      %p75 = por %p73, %p74
      %s77 = sadd.s32 %s76, 1
      %p80 = scmp.eq.s32.totalorder %s21, 1
      %p81 = scmp.ne.s32.totalorder %s76, %s78
      %p82 = scmp.eq.s32.totalorder %s21, 0
      %p83 = por %p81, %p82
      %p84 = scmp.ne.s32.totalorder %s76, %s78
      %p85 = scmp.eq.s32.totalorder %s26, 1
      %p86 = por %p84, %p85
      %p87 = scmp.ne.s32.totalorder %s78, %s79
      %p88 = scmp.eq.s32.totalorder %s26, 0
      %p89 = por %p87, %p88
      %p90 = scmp.ne.s32.totalorder %s78, %s79
      %p91 = scmp.eq.s32.totalorder %s27, 1
      %p92 = por %p90, %p91
      %p94 = scmp.ne.s32.totalorder %s79, %s93
      %p95 = scmp.eq.s32.totalorder %s27, 0
      %p96 = por %p94, %p95
      %s98 = sadd.s32 %s97, 1
      %p101 = scmp.eq.s32.totalorder %s21, 1
      %p102 = scmp.ne.s32.totalorder %s97, %s99
      %p103 = scmp.eq.s32.totalorder %s21, 0
      %p104 = por %p102, %p103
      %p105 = scmp.ne.s32.totalorder %s97, %s99
      %p106 = scmp.eq.s32.totalorder %s26, 1
      %p107 = por %p105, %p106
      %p108 = scmp.ne.s32.totalorder %s99, %s100
      %p109 = scmp.eq.s32.totalorder %s26, 0
      %p110 = por %p108, %p109
      %p111 = scmp.ne.s32.totalorder %s99, %s100
      %p112 = scmp.eq.s32.totalorder %s27, 1
      %p113 = por %p111, %p112
      %p115 = scmp.ne.s32.totalorder %s100, %s114
      %p116 = scmp.eq.s32.totalorder %s27, 0
      %p117 = por %p115, %p116
      %s119 = sadd.s32 %s118, 1
      %p122 = scmp.eq.s32.totalorder %s21, 1
      %p123 = scmp.ne.s32.totalorder %s118, %s120
      %p124 = scmp.eq.s32.totalorder %s21, 0
      %p125 = por %p123, %p124
      %p126 = scmp.ne.s32.totalorder %s118, %s120
      %p127 = scmp.eq.s32.totalorder %s26, 1
      %p128 = por %p126, %p127
      %p129 = scmp.ne.s32.totalorder %s120, %s121
      %p130 = scmp.eq.s32.totalorder %s26, 0
      %p131 = por %p129, %p130
      %p132 = scmp.ne.s32.totalorder %s120, %s121
      %p133 = scmp.eq.s32.totalorder %s27, 1
      %p134 = por %p132, %p133
      %p136 = scmp.ne.s32.totalorder %s121, %s135
      %p137 = scmp.eq.s32.totalorder %s27, 0
      %p138 = por %p136, %p137
      %s140 = sadd.s32 %s139, 1
      %p143 = scmp.eq.s32.totalorder %s21, 1
      %p144 = scmp.ne.s32.totalorder %s139, %s141
      %p145 = scmp.eq.s32.totalorder %s21, 0
      %p146 = por %p144, %p145
      %p147 = scmp.ne.s32.totalorder %s139, %s141
      %p148 = scmp.eq.s32.totalorder %s26, 1
      %p149 = por %p147, %p148
      %p150 = scmp.ne.s32.totalorder %s141, %s142
      %p151 = scmp.eq.s32.totalorder %s26, 0
      %p152 = por %p150, %p151
      %p153 = scmp.ne.s32.totalorder %s141, %s142
      %p154 = scmp.eq.s32.totalorder %s27, 1
      %p155 = por %p153, %p154
      %p157 = scmp.ne.s32.totalorder %s142, %s156
      %p158 = scmp.eq.s32.totalorder %s27, 0
      %p159 = por %p157, %p158
      %s161 = sadd.s32 %s160, 1
      %p164 = scmp.eq.s32.totalorder %s21, 1
      %p165 = scmp.ne.s32.totalorder %s160, %s162
      %p166 = scmp.eq.s32.totalorder %s21, 0
      %p167 = por %p165, %p166
      %p168 = scmp.ne.s32.totalorder %s160, %s162
      %p169 = scmp.eq.s32.totalorder %s26, 1
      %p170 = por %p168, %p169
      %p171 = scmp.ne.s32.totalorder %s162, %s163
      %p172 = scmp.eq.s32.totalorder %s26, 0
      %p173 = por %p171, %p172
      %p174 = scmp.ne.s32.totalorder %s162, %s163
      %p175 = scmp.eq.s32.totalorder %s27, 1
      %p176 = por %p174, %p175
      %p178 = scmp.ne.s32.totalorder %s163, %s177
      %p179 = scmp.eq.s32.totalorder %s27, 0
      %p180 = por %p178, %p179
      %s181 = ssub.s32 %s21, %s28
      %p182 = scmp.eq.s32.totalorder %s181, 0
      %s184 = sadd.s32 %s183, 1
      %s185 = scalar_select %p182, %s183, %s184
      %p188 = pneg %p182
      %p189 = scmp.eq.s32.totalorder %s21, 1
      %p190 = por %p188, %p189
      %p191 = scmp.ne.s32.totalorder %s183, %s186
      %p192 = scmp.eq.s32.totalorder %s21, 0
      %p193 = por %p191, %p192
      %p194 = scmp.ne.s32.totalorder %s183, %s186
      %p195 = scmp.eq.s32.totalorder %s26, 1
      %p196 = por %p194, %p195
      %p197 = scmp.ne.s32.totalorder %s186, %s187
      %p198 = scmp.eq.s32.totalorder %s26, 0
      %p199 = por %p197, %p198
      %p200 = scmp.ne.s32.totalorder %s186, %s187
      %p201 = scmp.eq.s32.totalorder %s27, 1
      %p202 = por %p200, %p201
      %p204 = scmp.ne.s32.totalorder %s187, %s203
      %p205 = scmp.eq.s32.totalorder %s27, 0
      %p206 = por %p204, %p205
      %p207 = scmp.le.s32.totalorder 1, %s21
      %p208 = scmp.lt.s32.totalorder %s21, 3
      %p209 = pnand %p207, %p208
      %p210 = pneg %p209
      // Predicated region
      $region9: #{tpu_custom_call.1} parent=5 // pred_check
        _
      $region10: #{tpu_custom_call.1} parent=5 // pred_check_branch
        %212 = sbr.rel (%p209) target = $region12
      $region11: #{tpu_custom_call.1} parent=5 // pred_region
        %s213 = ssub.s32 %s21, 1
        // Predicated region
        $region13: #{tpu_custom_call.1} parent=11 // pred_check
          %p214 = pneg %p68
        $region14: #{tpu_custom_call.1} parent=11 // pred_check_branch
          %216 = sbr.rel (%p214) target = $region16
        $region15: #{tpu_custom_call.1} parent=11 // pred_region
          %s218 = ssub.s32 2048, 2048
          %219 = vsyncadd [#allocation6], %s218
          %s220 = sshll.u32 [#allocation5], 4
          %s221 = int_to_ptr.vmem [resolvable:$true] %s220
          %226 = dma.hbm_to_vmem [thread:$0]  %s1, 2048, %s221, [#allocation6], 128, 128, 8
        $region16: #{tpu_custom_call.1} parent=11 // pred_fallthru
          _
        // Predicated region
        $region17: #{tpu_custom_call.1} parent=11 // pred_check
          %p227 = pneg %p89
        $region18: #{tpu_custom_call.1} parent=11 // pred_check_branch
          %229 = sbr.rel (%p227) target = $region20
        $region19: #{tpu_custom_call.1} parent=11 // pred_region
          _
        $region20: #{tpu_custom_call.1} parent=11 // pred_fallthru
          _
        // Predicated region
        $region21: #{tpu_custom_call.1} parent=11 // pred_check
          %p230 = pneg %p110
        $region22: #{tpu_custom_call.1} parent=11 // pred_check_branch
          %232 = sbr.rel (%p230) target = $region24
        $region23: #{tpu_custom_call.1} parent=11 // pred_region
          %s234 = ssub.s32 2048, 2048
          %235 = vsyncadd [#allocation6], %s234
          %s236 = sshll.u32 [#allocation7], 4
          %s237 = int_to_ptr.vmem [resolvable:$true] %s236
          %242 = dma.hbm_to_vmem [thread:$0]  %s3, 2048, %s237, [#allocation6], 64, 64, 4
        $region24: #{tpu_custom_call.1} parent=11 // pred_fallthru
          _
        // Predicated region
        $region25: #{tpu_custom_call.1} parent=11 // pred_check
          %p243 = pneg %p131
        $region26: #{tpu_custom_call.1} parent=11 // pred_check_branch
          %245 = sbr.rel (%p243) target = $region28
        $region27: #{tpu_custom_call.1} parent=11 // pred_region
          _
        $region28: #{tpu_custom_call.1} parent=11 // pred_fallthru
          _
        // Predicated region
        $region29: #{tpu_custom_call.1} parent=11 // pred_check
          %p246 = pneg %p152
        $region30: #{tpu_custom_call.1} parent=11 // pred_check_branch
          %248 = sbr.rel (%p246) target = $region32
        $region31: #{tpu_custom_call.1} parent=11 // pred_region
          %s250 = ssub.s32 2048, 2048
          %251 = vsyncadd [#allocation9], %s250
          %s252 = sshll.u32 [#allocation8], 4
          %s253 = int_to_ptr.vmem [resolvable:$true] %s252
          %258 = dma.hbm_to_vmem [thread:$0]  %s5, 2048, %s253, [#allocation9], 128, 128, 8
        $region32: #{tpu_custom_call.1} parent=11 // pred_fallthru
          _
        // Predicated region
        $region33: #{tpu_custom_call.1} parent=11 // pred_check
          %p259 = pneg %p173
        $region34: #{tpu_custom_call.1} parent=11 // pred_check_branch
          %261 = sbr.rel (%p259) target = $region36
        $region35: #{tpu_custom_call.1} parent=11 // pred_region
          _
        $region36: #{tpu_custom_call.1} parent=11 // pred_fallthru
          _
      $region12: #{tpu_custom_call.1} parent=5 // pred_fallthru
        _
      %p262 = scmp.lt.s32.totalorder %s21, 2
      // Predicated region
      $region37: #{tpu_custom_call.1} parent=5 // pred_check
        %p263 = pneg %p262
      $region38: #{tpu_custom_call.1} parent=5 // pred_check_branch
        %265 = sbr.rel (%p263) target = $region40
      $region39: #{tpu_custom_call.1} parent=5 // pred_region
        // Predicated region
        $region41: #{tpu_custom_call.1} parent=39 // pred_check
          %p266 = pneg %p41
        $region42: #{tpu_custom_call.1} parent=39 // pred_check_branch
          %268 = sbr.rel (%p266) target = $region44
        $region43: #{tpu_custom_call.1} parent=39 // pred_region
          %s269 = sand.u32 %s31, 1
          %s270 = scalar_lea.sflag [#allocation3], %s269
          %s271 = sand.u32 %s31, 1
          %s272 = smul.addr %s271, 256
          %s273 = scalar_lea.vmem [#allocation2], %s272
          %s274 = smul.u32 32, %s21
          %s276 = ssub.s32 4096, 4096
          %277 = vsyncadd %s270, %s276
          %s278 = smul.addr %s274, 128
          %s279 = scalar_lea.hbm %s0, %s278
          %s280 = sshll.u32 %s273, 4
          %s281 = int_to_ptr.vmem [resolvable:$true] %s280
          %286 = dma.hbm_to_vmem [thread:$0]  %s279, 4096, %s281, %s270, 128, 128, 8
        $region44: #{tpu_custom_call.1} parent=39 // pred_fallthru
          _
      $region40: #{tpu_custom_call.1} parent=5 // pred_fallthru
        _
      %p287 = scmp.le.s32.totalorder 1, %s21
      %p288 = scmp.lt.s32.totalorder %s21, 3
      %p289 = pnand %p287, %p288
      %p290 = pneg %p289
      // Predicated region
      $region45: #{tpu_custom_call.1} parent=5 // pred_check
        _
      $region46: #{tpu_custom_call.1} parent=5 // pred_check_branch
        %292 = sbr.rel (%p289) target = $region48
      $region47: #{tpu_custom_call.1} parent=5 // pred_region
        %s293 = ssub.s32 %s21, 1
        %s294 = sand.u32 %s34, 1
        %s295 = scalar_lea.sflag [#allocation3], %s294
        %s296 = sand.u32 %s34, 1
        %s297 = smul.addr %s296, 256
        %s298 = scalar_lea.vmem [#allocation2], %s297
        // Predicated region
        $region49: #{tpu_custom_call.1} parent=47 // pred_check
          %p299 = pneg %p47
        $region50: #{tpu_custom_call.1} parent=47 // pred_check_branch
          %301 = sbr.rel (%p299) target = $region52
        $region51: #{tpu_custom_call.1} parent=47 // pred_region
          %302 = dma.done %s295, 4096
        $region52: #{tpu_custom_call.1} parent=47 // pred_fallthru
          _
        // Predicated region
        $region53: #{tpu_custom_call.1} parent=47 // pred_check
          %p303 = pneg %p68
        $region54: #{tpu_custom_call.1} parent=47 // pred_check_branch
          %305 = sbr.rel (%p303) target = $region56
        $region55: #{tpu_custom_call.1} parent=47 // pred_region
          %306 = dma.done [#allocation6], 2048
        $region56: #{tpu_custom_call.1} parent=47 // pred_fallthru
          _
        // Predicated region
        $region57: #{tpu_custom_call.1} parent=47 // pred_check
          %p307 = pneg %p110
        $region58: #{tpu_custom_call.1} parent=47 // pred_check_branch
          %309 = sbr.rel (%p307) target = $region60
        $region59: #{tpu_custom_call.1} parent=47 // pred_region
          %310 = dma.done [#allocation6], 2048
        $region60: #{tpu_custom_call.1} parent=47 // pred_fallthru
          _
        // Predicated region
        $region61: #{tpu_custom_call.1} parent=47 // pred_check
          %p311 = pneg %p152
        $region62: #{tpu_custom_call.1} parent=47 // pred_check_branch
          %313 = sbr.rel (%p311) target = $region64
        $region63: #{tpu_custom_call.1} parent=47 // pred_region
          %314 = dma.done [#allocation9], 2048
        $region64: #{tpu_custom_call.1} parent=47 // pred_fallthru
          _
        %s315 = sand.u32 %s34, 1
        %s316 = scalar_lea.sflag [#allocation3], %s315
        %s317 = sand.u32 %s34, 1
        %s318 = smul.addr %s317, 256
        %s319 = scalar_lea.vmem [#allocation2], %s318
        %p320 = pneg %p47
        %p321 = pneg %p44
        %p322 = pneg %p68
        %p323 = pneg %p65
        %p324 = pneg %p89
        %p325 = pneg %p86
        %p326 = pneg %p110
        %p327 = pneg %p107
        %p328 = pneg %p131
        %p329 = pneg %p128
        %p330 = pneg %p152
        %p331 = pneg %p149
        %p332 = pneg %p173
        %p333 = pneg %p170
        %p334 = pneg %p199
        %p335 = pneg %p196
        %s336 = sand.u32 %s186, 1
        %s337 = scalar_lea.sflag [#allocation4], %s336
        %s338 = sand.u32 %s186, 1
        %s339 = smul.addr %s338, 512
        %s340 = scalar_lea.vmem [#allocation10], %s339
        %s341 = smul.u32 32, %s26
        %s342 = smul.u32 32, %s26
        %v344 = vld [vmem:[%s298] sm:$0xff]
        %v345 = vld [vmem:[%s298 + $0x8] sm:$0xff]
        %v346 = vld [vmem:[%s298 + $0x10] sm:$0xff]
        %v347 = vld [vmem:[%s298 + $0x18] sm:$0xff]
        %v348 = vld [vmem:[%s298 + $0x20] sm:$0xff]
        %v349 = vld [vmem:[%s298 + $0x28] sm:$0xff]
        %v350 = vld [vmem:[%s298 + $0x30] sm:$0xff]
        %v351 = vld [vmem:[%s298 + $0x38] sm:$0xff]
        %v352 = vld [vmem:[%s298 + $0x40] sm:$0xff]
        %v353 = vld [vmem:[%s298 + $0x48] sm:$0xff]
        %v354 = vld [vmem:[%s298 + $0x50] sm:$0xff]
        %v355 = vld [vmem:[%s298 + $0x58] sm:$0xff]
        %v356 = vld [vmem:[%s298 + $0x60] sm:$0xff]
        %v357 = vld [vmem:[%s298 + $0x68] sm:$0xff]
        %v358 = vld [vmem:[%s298 + $0x70] sm:$0xff]
        %v359 = vld [vmem:[%s298 + $0x78] sm:$0xff]
        %v360 = vld [vmem:[%s298 + $0x80] sm:$0xff]
        %v361 = vld [vmem:[%s298 + $0x88] sm:$0xff]
        %v362 = vld [vmem:[%s298 + $0x90] sm:$0xff]
        %v363 = vld [vmem:[%s298 + $0x98] sm:$0xff]
        %v364 = vld [vmem:[%s298 + $0xa0] sm:$0xff]
        %v365 = vld [vmem:[%s298 + $0xa8] sm:$0xff]
        %v366 = vld [vmem:[%s298 + $0xb0] sm:$0xff]
        %v367 = vld [vmem:[%s298 + $0xb8] sm:$0xff]
        %v368 = vld [vmem:[%s298 + $0xc0] sm:$0xff]
        %v369 = vld [vmem:[%s298 + $0xc8] sm:$0xff]
        %v370 = vld [vmem:[%s298 + $0xd0] sm:$0xff]
        %v371 = vld [vmem:[%s298 + $0xd8] sm:$0xff]
        %v372 = vld [vmem:[%s298 + $0xe0] sm:$0xff]
        %v373 = vld [vmem:[%s298 + $0xe8] sm:$0xff]
        %v374 = vld [vmem:[%s298 + $0xf0] sm:$0xff]
        %v375 = vld [vmem:[%s298 + $0xf8] sm:$0xff]
        %v376 = vpack.c.bf16 %v345, %v344
        %v377 = vpack.c.bf16 %v347, %v346
        %v378 = vpack.c.bf16 %v349, %v348
        %v379 = vpack.c.bf16 %v351, %v350
        %v380 = vpack.c.bf16 %v353, %v352
        %v381 = vpack.c.bf16 %v355, %v354
        %v382 = vpack.c.bf16 %v357, %v356
        %v383 = vpack.c.bf16 %v359, %v358
        %v384 = vpack.c.bf16 %v361, %v360
        %v385 = vpack.c.bf16 %v363, %v362
        %v386 = vpack.c.bf16 %v365, %v364
        %v387 = vpack.c.bf16 %v367, %v366
        %v388 = vpack.c.bf16 %v369, %v368
        %v389 = vpack.c.bf16 %v371, %v370
        %v390 = vpack.c.bf16 %v373, %v372
        %v391 = vpack.c.bf16 %v375, %v374
        %v392 = vld [vmem:[#allocation5] sm:$0xff]
        %v393 = vld [vmem:[#allocation5 + $0x8] sm:$0xff]
        %v394 = vld [vmem:[#allocation5 + $0x10] sm:$0xff]
        %v395 = vld [vmem:[#allocation5 + $0x18] sm:$0xff]
        %v396 = vld [vmem:[#allocation5 + $0x20] sm:$0xff]
        %v397 = vld [vmem:[#allocation5 + $0x28] sm:$0xff]
        %v398 = vld [vmem:[#allocation5 + $0x30] sm:$0xff]
        %v399 = vld [vmem:[#allocation5 + $0x38] sm:$0xff]
        %v400 = vld [vmem:[#allocation5 + $0x40] sm:$0xff]
        %v401 = vld [vmem:[#allocation5 + $0x48] sm:$0xff]
        %v402 = vld [vmem:[#allocation5 + $0x50] sm:$0xff]
        %v403 = vld [vmem:[#allocation5 + $0x58] sm:$0xff]
        %v404 = vld [vmem:[#allocation5 + $0x60] sm:$0xff]
        %v405 = vld [vmem:[#allocation5 + $0x68] sm:$0xff]
        %v406 = vld [vmem:[#allocation5 + $0x70] sm:$0xff]
        %v407 = vld [vmem:[#allocation5 + $0x78] sm:$0xff]
        %v408 = vld [vmem:[%s2] sm:$0x3]
        %v410 = vlaneseq
        %v411 = vshrl.u32 %v410, 7
        %v412 = vsub.s32 0, %v411
        %v413 = vrot.slane %v408, %v412
        %v414 = vlaneseq
        %v415 = vshrl.u32 %v414, 7
        %v416 = vsub.s32 1, %v415
        %v417 = vrot.slane %v408, %v416
        %v436 = vunpack.c.l.b16 %v392
        %v437 = vunpack.c.h.b16 %v392
        %v438 = vunpack.c.l.b16 %v393
        %v439 = vunpack.c.h.b16 %v393
        %v440 = vunpack.c.l.b16 %v394
        %v441 = vunpack.c.h.b16 %v394
        %v442 = vunpack.c.l.b16 %v395
        %v443 = vunpack.c.h.b16 %v395
        %v444 = vunpack.c.l.b16 %v396
        %v445 = vunpack.c.h.b16 %v396
        %v446 = vunpack.c.l.b16 %v397
        %v447 = vunpack.c.h.b16 %v397
        %v448 = vunpack.c.l.b16 %v398
        %v449 = vunpack.c.h.b16 %v398
        %v450 = vunpack.c.l.b16 %v399
        %v451 = vunpack.c.h.b16 %v399
        %v452 = vunpack.c.l.b16 %v400
        %v453 = vunpack.c.h.b16 %v400
        %v454 = vunpack.c.l.b16 %v401
        %v455 = vunpack.c.h.b16 %v401
        %v456 = vunpack.c.l.b16 %v402
        %v457 = vunpack.c.h.b16 %v402
        %v458 = vunpack.c.l.b16 %v403
        %v459 = vunpack.c.h.b16 %v403
        %v460 = vunpack.c.l.b16 %v404
        %v461 = vunpack.c.h.b16 %v404
        %v462 = vunpack.c.l.b16 %v405
        %v463 = vunpack.c.h.b16 %v405
        %v464 = vunpack.c.l.b16 %v406
        %v465 = vunpack.c.h.b16 %v406
        %v466 = vunpack.c.l.b16 %v407
        %v467 = vunpack.c.h.b16 %v407
        %v468 = vpack.c.b16 %v438, %v436
        %v469 = vpack.c.b16 %v439, %v437
        %v470 = vpack.c.b16 %v442, %v440
        %v471 = vpack.c.b16 %v443, %v441
        %v472 = vpack.c.b16 %v446, %v444
        %v473 = vpack.c.b16 %v447, %v445
        %v474 = vpack.c.b16 %v450, %v448
        %v475 = vpack.c.b16 %v451, %v449
        %v476 = vpack.c.b16 %v454, %v452
        %v477 = vpack.c.b16 %v455, %v453
        %v478 = vpack.c.b16 %v458, %v456
        %v479 = vpack.c.b16 %v459, %v457
        %v480 = vpack.c.b16 %v462, %v460
        %v481 = vpack.c.b16 %v463, %v461
        %v482 = vpack.c.b16 %v466, %v464
        %v483 = vpack.c.b16 %v467, %v465
        %500 = vmatprep.subr.bf16.mxu0 %v483
        %501 = vmatpush1.bf16.msra.mxu0 %v482
        %502 = vmatprep.subr.bf16.mxu0 %v481
        %503 = vmatpush1.bf16.msra.mxu0 %v480
        %504 = vmatprep.subr.bf16.mxu0 %v479
        %505 = vmatpush1.bf16.msra.mxu0 %v478
        %506 = vmatprep.subr.bf16.mxu0 %v477
        %507 = vmatpush1.bf16.msra.mxu0 %v476
        %508 = vmatprep.subr.bf16.mxu0 %v475
        %509 = vmatpush1.bf16.msra.mxu0 %v474
        %510 = vmatprep.subr.bf16.mxu0 %v473
        %511 = vmatpush1.bf16.msra.mxu0 %v472
        %512 = vmatprep.subr.bf16.mxu0 %v471
        %513 = vmatpush1.bf16.msra.mxu0 %v470
        %514 = vmatprep.subr.bf16.mxu0 %v469
        %515 = vmatpush1.bf16.msra.mxu0 %v468
        %516 = vmatprep.subr.bf16.mxu0 0
        %517 = vmatpush2.bf16.msra.mxu0 0
        %518 = vmatprep.subr.bf16.mxu0 0
        %519 = vmatpush2.bf16.msra.mxu0 0
        %520 = vmatprep.subr.bf16.mxu0 0
        %521 = vmatpush2.bf16.msra.mxu0 0
        %522 = vmatprep.subr.bf16.mxu0 0
        %523 = vmatpush2.bf16.msra.mxu0 0
        %524 = vmatprep.subr.bf16.mxu0 0
        %525 = vmatpush2.bf16.msra.mxu0 0
        %526 = vmatprep.subr.bf16.mxu0 0
        %527 = vmatpush2.bf16.msra.mxu0 0
        %528 = vmatprep.subr.bf16.mxu0 0
        %529 = vmatpush2.bf16.msra.mxu0 0
        %530 = vmatprep.subr.bf16.mxu0 0
        %531 = vmatpush2.bf16.msra.mxu0 0
        %532 = vmatprep.mubr.bf16.mxu0 0
        %533 = vmatmul.mubr.bf16.gmra.mxu0 %v376
        %v534 = vpop.f32.mrf.mxu0
        %v535 = vadd.f32 %v413, %v534
        %v536 = vpop.f32.mrf.mxu0
        %v537 = vadd.f32 %v417, %v536
        %v538 = vpop.f32.mrf.mxu0
        %v539 = vadd.f32 %v413, %v538
        %v540 = vpop.f32.mrf.mxu0
        %v541 = vadd.f32 %v417, %v540
        %542 = vmatprep.mubr.bf16.mxu0 0
        %543 = vmatmul.mubr.bf16.gmra.mxu0 %v377
        %v544 = vpop.f32.mrf.mxu0
        %v545 = vadd.f32 %v413, %v544
        %v546 = vpop.f32.mrf.mxu0
        %v547 = vadd.f32 %v417, %v546
        %v548 = vpop.f32.mrf.mxu0
        %v549 = vadd.f32 %v413, %v548
        %v550 = vpop.f32.mrf.mxu0
        %v551 = vadd.f32 %v417, %v550
        %552 = vmatprep.mubr.bf16.mxu0 0
        %553 = vmatmul.mubr.bf16.gmra.mxu0 %v378
        %v554 = vpop.f32.mrf.mxu0
        %v555 = vadd.f32 %v413, %v554
        %v556 = vpop.f32.mrf.mxu0
        %v557 = vadd.f32 %v417, %v556
        %v558 = vpop.f32.mrf.mxu0
        %v559 = vadd.f32 %v413, %v558
        %v560 = vpop.f32.mrf.mxu0
        %v561 = vadd.f32 %v417, %v560
        %562 = vmatprep.mubr.bf16.mxu0 0
        %563 = vmatmul.mubr.bf16.gmra.mxu0 %v379
        %v564 = vpop.f32.mrf.mxu0
        %v565 = vadd.f32 %v413, %v564
        %v566 = vpop.f32.mrf.mxu0
        %v567 = vadd.f32 %v417, %v566
        %v568 = vpop.f32.mrf.mxu0
        %v569 = vadd.f32 %v413, %v568
        %v570 = vpop.f32.mrf.mxu0
        %v571 = vadd.f32 %v417, %v570
        %572 = vmatprep.mubr.bf16.mxu0 0
        %573 = vmatmul.mubr.bf16.gmra.mxu0 %v380
        %v574 = vpop.f32.mrf.mxu0
        %v575 = vadd.f32 %v413, %v574
        %v576 = vpop.f32.mrf.mxu0
        %v577 = vadd.f32 %v417, %v576
        %v578 = vpop.f32.mrf.mxu0
        %v579 = vadd.f32 %v413, %v578
        %v580 = vpop.f32.mrf.mxu0
        %v581 = vadd.f32 %v417, %v580
        %582 = vmatprep.mubr.bf16.mxu0 0
        %583 = vmatmul.mubr.bf16.gmra.mxu0 %v381
        %v584 = vpop.f32.mrf.mxu0
        %v585 = vadd.f32 %v413, %v584
        %v586 = vpop.f32.mrf.mxu0
        %v587 = vadd.f32 %v417, %v586
        %v588 = vpop.f32.mrf.mxu0
        %v589 = vadd.f32 %v413, %v588
        %v590 = vpop.f32.mrf.mxu0
        %v591 = vadd.f32 %v417, %v590
        %592 = vmatprep.mubr.bf16.mxu0 0
        %593 = vmatmul.mubr.bf16.gmra.mxu0 %v382
        %v594 = vpop.f32.mrf.mxu0
        %v595 = vadd.f32 %v413, %v594
        %v596 = vpop.f32.mrf.mxu0
        %v597 = vadd.f32 %v417, %v596
        %v598 = vpop.f32.mrf.mxu0
        %v599 = vadd.f32 %v413, %v598
        %v600 = vpop.f32.mrf.mxu0
        %v601 = vadd.f32 %v417, %v600
        %602 = vmatprep.mubr.bf16.mxu0 0
        %603 = vmatmul.mubr.bf16.gmra.mxu0 %v383
        %v604 = vpop.f32.mrf.mxu0
        %v605 = vadd.f32 %v413, %v604
        %v606 = vpop.f32.mrf.mxu0
        %v607 = vadd.f32 %v417, %v606
        %v608 = vpop.f32.mrf.mxu0
        %v609 = vadd.f32 %v413, %v608
        %v610 = vpop.f32.mrf.mxu0
        %v611 = vadd.f32 %v417, %v610
        %612 = vmatprep.mubr.bf16.mxu0 0
        %613 = vmatmul.mubr.bf16.gmra.mxu0 %v384
        %v614 = vpop.f32.mrf.mxu0
        %v615 = vadd.f32 %v413, %v614
        %v616 = vpop.f32.mrf.mxu0
        %v617 = vadd.f32 %v417, %v616
        %v618 = vpop.f32.mrf.mxu0
        %v619 = vadd.f32 %v413, %v618
        %v620 = vpop.f32.mrf.mxu0
        %v621 = vadd.f32 %v417, %v620
        %622 = vmatprep.mubr.bf16.mxu0 0
        %623 = vmatmul.mubr.bf16.gmra.mxu0 %v385
        %v624 = vpop.f32.mrf.mxu0
        %v625 = vadd.f32 %v413, %v624
        %v626 = vpop.f32.mrf.mxu0
        %v627 = vadd.f32 %v417, %v626
        %v628 = vpop.f32.mrf.mxu0
        %v629 = vadd.f32 %v413, %v628
        %v630 = vpop.f32.mrf.mxu0
        %v631 = vadd.f32 %v417, %v630
        %632 = vmatprep.mubr.bf16.mxu0 0
        %633 = vmatmul.mubr.bf16.gmra.mxu0 %v386
        %v634 = vpop.f32.mrf.mxu0
        %v635 = vadd.f32 %v413, %v634
        %v636 = vpop.f32.mrf.mxu0
        %v637 = vadd.f32 %v417, %v636
        %v638 = vpop.f32.mrf.mxu0
        %v639 = vadd.f32 %v413, %v638
        %v640 = vpop.f32.mrf.mxu0
        %v641 = vadd.f32 %v417, %v640
        %642 = vmatprep.mubr.bf16.mxu0 0
        %643 = vmatmul.mubr.bf16.gmra.mxu0 %v387
        %v644 = vpop.f32.mrf.mxu0
        %v645 = vadd.f32 %v413, %v644
        %v646 = vpop.f32.mrf.mxu0
        %v647 = vadd.f32 %v417, %v646
        %v648 = vpop.f32.mrf.mxu0
        %v649 = vadd.f32 %v413, %v648
        %v650 = vpop.f32.mrf.mxu0
        %v651 = vadd.f32 %v417, %v650
        %652 = vmatprep.mubr.bf16.mxu0 0
        %653 = vmatmul.mubr.bf16.gmra.mxu0 %v388
        %v654 = vpop.f32.mrf.mxu0
        %v655 = vadd.f32 %v413, %v654
        %v656 = vpop.f32.mrf.mxu0
        %v657 = vadd.f32 %v417, %v656
        %v658 = vpop.f32.mrf.mxu0
        %v659 = vadd.f32 %v413, %v658
        %v660 = vpop.f32.mrf.mxu0
        %v661 = vadd.f32 %v417, %v660
        %662 = vmatprep.mubr.bf16.mxu0 0
        %663 = vmatmul.mubr.bf16.gmra.mxu0 %v389
        %v664 = vpop.f32.mrf.mxu0
        %v665 = vadd.f32 %v413, %v664
        %v666 = vpop.f32.mrf.mxu0
        %v667 = vadd.f32 %v417, %v666
        %v668 = vpop.f32.mrf.mxu0
        %v669 = vadd.f32 %v413, %v668
        %v670 = vpop.f32.mrf.mxu0
        %v671 = vadd.f32 %v417, %v670
        %672 = vmatprep.mubr.bf16.mxu0 0
        %673 = vmatmul.mubr.bf16.gmra.mxu0 %v390
        %v674 = vpop.f32.mrf.mxu0
        %v675 = vadd.f32 %v413, %v674
        %v676 = vpop.f32.mrf.mxu0
        %v677 = vadd.f32 %v417, %v676
        %v678 = vpop.f32.mrf.mxu0
        %v679 = vadd.f32 %v413, %v678
        %v680 = vpop.f32.mrf.mxu0
        %v681 = vadd.f32 %v417, %v680
        %682 = vmatprep.mubr.bf16.mxu0 0
        %683 = vmatmul.mubr.bf16.gmra.mxu0 %v391
        %v684 = vpop.f32.mrf.mxu0
        %v685 = vadd.f32 %v413, %v684
        %v686 = vpop.f32.mrf.mxu0
        %v687 = vadd.f32 %v417, %v686
        %v688 = vpop.f32.mrf.mxu0
        %v689 = vadd.f32 %v413, %v688
        %v690 = vpop.f32.mrf.mxu0
        %v691 = vadd.f32 %v417, %v690
        %692 = vdwg.mxu0
        %v693 = vmax.f32 %v535, 0.0
        %v694 = vmax.f32 %v537, 0.0
        %v695 = vmax.f32 %v539, 0.0
        %v696 = vmax.f32 %v541, 0.0
        %v697 = vmax.f32 %v545, 0.0
        %v698 = vmax.f32 %v547, 0.0
        %v699 = vmax.f32 %v549, 0.0
        %v700 = vmax.f32 %v551, 0.0
        %v701 = vmax.f32 %v555, 0.0
        %v702 = vmax.f32 %v557, 0.0
        %v703 = vmax.f32 %v559, 0.0
        %v704 = vmax.f32 %v561, 0.0
        %v705 = vmax.f32 %v565, 0.0
        %v706 = vmax.f32 %v567, 0.0
        %v707 = vmax.f32 %v569, 0.0
        %v708 = vmax.f32 %v571, 0.0
        %v709 = vmax.f32 %v575, 0.0
        %v710 = vmax.f32 %v577, 0.0
        %v711 = vmax.f32 %v579, 0.0
        %v712 = vmax.f32 %v581, 0.0
        %v713 = vmax.f32 %v585, 0.0
        %v714 = vmax.f32 %v587, 0.0
        %v715 = vmax.f32 %v589, 0.0
        %v716 = vmax.f32 %v591, 0.0
        %v717 = vmax.f32 %v595, 0.0
        %v718 = vmax.f32 %v597, 0.0
        %v719 = vmax.f32 %v599, 0.0
        %v720 = vmax.f32 %v601, 0.0
        %v721 = vmax.f32 %v605, 0.0
        %v722 = vmax.f32 %v607, 0.0
        %v723 = vmax.f32 %v609, 0.0
        %v724 = vmax.f32 %v611, 0.0
        %v725 = vmax.f32 %v615, 0.0
        %v726 = vmax.f32 %v617, 0.0
        %v727 = vmax.f32 %v619, 0.0
        %v728 = vmax.f32 %v621, 0.0
        %v729 = vmax.f32 %v625, 0.0
        %v730 = vmax.f32 %v627, 0.0
        %v731 = vmax.f32 %v629, 0.0
        %v732 = vmax.f32 %v631, 0.0
        %v733 = vmax.f32 %v635, 0.0
        %v734 = vmax.f32 %v637, 0.0
        %v735 = vmax.f32 %v639, 0.0
        %v736 = vmax.f32 %v641, 0.0
        %v737 = vmax.f32 %v645, 0.0
        %v738 = vmax.f32 %v647, 0.0
        %v739 = vmax.f32 %v649, 0.0
        %v740 = vmax.f32 %v651, 0.0
        %v741 = vmax.f32 %v655, 0.0
        %v742 = vmax.f32 %v657, 0.0
        %v743 = vmax.f32 %v659, 0.0
        %v744 = vmax.f32 %v661, 0.0
        %v745 = vmax.f32 %v665, 0.0
        %v746 = vmax.f32 %v667, 0.0
        %v747 = vmax.f32 %v669, 0.0
        %v748 = vmax.f32 %v671, 0.0
        %v749 = vmax.f32 %v675, 0.0
        %v750 = vmax.f32 %v677, 0.0
        %v751 = vmax.f32 %v679, 0.0
        %v752 = vmax.f32 %v681, 0.0
        %v753 = vmax.f32 %v685, 0.0
        %v754 = vmax.f32 %v687, 0.0
        %v755 = vmax.f32 %v689, 0.0
        %v756 = vmax.f32 %v691, 0.0
        %v757 = vpack.c.bf16 %v695, %v693
        %v758 = vpack.c.bf16 %v696, %v694
        %v759 = vpack.c.bf16 %v699, %v697
        %v760 = vpack.c.bf16 %v700, %v698
        %v761 = vpack.c.bf16 %v703, %v701
        %v762 = vpack.c.bf16 %v704, %v702
        %v763 = vpack.c.bf16 %v707, %v705
        %v764 = vpack.c.bf16 %v708, %v706
        %v765 = vpack.c.bf16 %v711, %v709
        %v766 = vpack.c.bf16 %v712, %v710
        %v767 = vpack.c.bf16 %v715, %v713
        %v768 = vpack.c.bf16 %v716, %v714
        %v769 = vpack.c.bf16 %v719, %v717
        %v770 = vpack.c.bf16 %v720, %v718
        %v771 = vpack.c.bf16 %v723, %v721
        %v772 = vpack.c.bf16 %v724, %v722
        %v773 = vpack.c.bf16 %v727, %v725
        %v774 = vpack.c.bf16 %v728, %v726
        %v775 = vpack.c.bf16 %v731, %v729
        %v776 = vpack.c.bf16 %v732, %v730
        %v777 = vpack.c.bf16 %v735, %v733
        %v778 = vpack.c.bf16 %v736, %v734
        %v779 = vpack.c.bf16 %v739, %v737
        %v780 = vpack.c.bf16 %v740, %v738
        %v781 = vpack.c.bf16 %v743, %v741
        %v782 = vpack.c.bf16 %v744, %v742
        %v783 = vpack.c.bf16 %v747, %v745
        %v784 = vpack.c.bf16 %v748, %v746
        %v785 = vpack.c.bf16 %v751, %v749
        %v786 = vpack.c.bf16 %v752, %v750
        %v787 = vpack.c.bf16 %v755, %v753
        %v788 = vpack.c.bf16 %v756, %v754
        %v789 = vld [vmem:[#allocation7] sm:$0xf]
        %v790 = vld [vmem:[#allocation7 + $0x4] sm:$0xf]
        %v791 = vld [vmem:[#allocation7 + $0x8] sm:$0xf]
        %v792 = vld [vmem:[#allocation7 + $0xc] sm:$0xf]
        %v793 = vld [vmem:[#allocation7 + $0x10] sm:$0xf]
        %v794 = vld [vmem:[#allocation7 + $0x14] sm:$0xf]
        %v795 = vld [vmem:[#allocation7 + $0x18] sm:$0xf]
        %v796 = vld [vmem:[#allocation7 + $0x1c] sm:$0xf]
        %v797 = vld [vmem:[#allocation7 + $0x20] sm:$0xf]
        %v798 = vld [vmem:[#allocation7 + $0x24] sm:$0xf]
        %v799 = vld [vmem:[#allocation7 + $0x28] sm:$0xf]
        %v800 = vld [vmem:[#allocation7 + $0x2c] sm:$0xf]
        %v801 = vld [vmem:[#allocation7 + $0x30] sm:$0xf]
        %v802 = vld [vmem:[#allocation7 + $0x34] sm:$0xf]
        %v803 = vld [vmem:[#allocation7 + $0x38] sm:$0xf]
        %v804 = vld [vmem:[#allocation7 + $0x3c] sm:$0xf]
        %v805 = vld [vmem:[#allocation7 + $0x40] sm:$0xf]
        %v806 = vld [vmem:[#allocation7 + $0x44] sm:$0xf]
        %v807 = vld [vmem:[#allocation7 + $0x48] sm:$0xf]
        %v808 = vld [vmem:[#allocation7 + $0x4c] sm:$0xf]
        %v809 = vld [vmem:[#allocation7 + $0x50] sm:$0xf]
        %v810 = vld [vmem:[#allocation7 + $0x54] sm:$0xf]
        %v811 = vld [vmem:[#allocation7 + $0x58] sm:$0xf]
        %v812 = vld [vmem:[#allocation7 + $0x5c] sm:$0xf]
        %v813 = vld [vmem:[#allocation7 + $0x60] sm:$0xf]
        %v814 = vld [vmem:[#allocation7 + $0x64] sm:$0xf]
        %v815 = vld [vmem:[#allocation7 + $0x68] sm:$0xf]
        %v816 = vld [vmem:[#allocation7 + $0x6c] sm:$0xf]
        %v817 = vld [vmem:[#allocation7 + $0x70] sm:$0xf]
        %v818 = vld [vmem:[#allocation7 + $0x74] sm:$0xf]
        %v819 = vld [vmem:[#allocation7 + $0x78] sm:$0xf]
        %v820 = vld [vmem:[#allocation7 + $0x7c] sm:$0xf]
        %v821 = vld [vmem:[%s4] sm:$0x1]
        %v823 = vlaneseq
        %v824 = vshrl.u32 %v823, 7
        %v825 = vsub.s32 0, %v824
        %v826 = vrot.slane %v821, %v825
        %v860 = vunpack.c.l.b16 %v789
        %v861 = vunpack.c.l.b16 %v790
        %v862 = vunpack.c.l.b16 %v791
        %v863 = vunpack.c.l.b16 %v792
        %v864 = vunpack.c.l.b16 %v793
        %v865 = vunpack.c.l.b16 %v794
        %v866 = vunpack.c.l.b16 %v795
        %v867 = vunpack.c.l.b16 %v796
        %v868 = vunpack.c.l.b16 %v797
        %v869 = vunpack.c.l.b16 %v798
        %v870 = vunpack.c.l.b16 %v799
        %v871 = vunpack.c.l.b16 %v800
        %v872 = vunpack.c.l.b16 %v801
        %v873 = vunpack.c.l.b16 %v802
        %v874 = vunpack.c.l.b16 %v803
        %v875 = vunpack.c.l.b16 %v804
        %v876 = vunpack.c.l.b16 %v805
        %v877 = vunpack.c.l.b16 %v806
        %v878 = vunpack.c.l.b16 %v807
        %v879 = vunpack.c.l.b16 %v808
        %v880 = vunpack.c.l.b16 %v809
        %v881 = vunpack.c.l.b16 %v810
        %v882 = vunpack.c.l.b16 %v811
        %v883 = vunpack.c.l.b16 %v812
        %v884 = vunpack.c.l.b16 %v813
        %v885 = vunpack.c.l.b16 %v814
        %v886 = vunpack.c.l.b16 %v815
        %v887 = vunpack.c.l.b16 %v816
        %v888 = vunpack.c.l.b16 %v817
        %v889 = vunpack.c.l.b16 %v818
        %v890 = vunpack.c.l.b16 %v819
        %v891 = vunpack.c.l.b16 %v820
        %v892 = vpack.c.b16 %v861, %v860
        %v893 = vpack.c.b16 %v863, %v862
        %v894 = vpack.c.b16 %v865, %v864
        %v895 = vpack.c.b16 %v867, %v866
        %v896 = vpack.c.b16 %v869, %v868
        %v897 = vpack.c.b16 %v871, %v870
        %v898 = vpack.c.b16 %v873, %v872
        %v899 = vpack.c.b16 %v875, %v874
        %v900 = vpack.c.b16 %v877, %v876
        %v901 = vpack.c.b16 %v879, %v878
        %v902 = vpack.c.b16 %v881, %v880
        %v903 = vpack.c.b16 %v883, %v882
        %v904 = vpack.c.b16 %v885, %v884
        %v905 = vpack.c.b16 %v887, %v886
        %v906 = vpack.c.b16 %v889, %v888
        %v907 = vpack.c.b16 %v891, %v890
        %924 = vmatprep.subr.bf16.mxu0 0
        %925 = vmatpush1.bf16.msra.mxu0 %v899
        %926 = vmatprep.subr.bf16.mxu0 0
        %927 = vmatpush1.bf16.msra.mxu0 %v898
        %928 = vmatprep.subr.bf16.mxu0 0
        %929 = vmatpush1.bf16.msra.mxu0 %v897
        %930 = vmatprep.subr.bf16.mxu0 0
        %931 = vmatpush1.bf16.msra.mxu0 %v896
        %932 = vmatprep.subr.bf16.mxu0 0
        %933 = vmatpush1.bf16.msra.mxu0 %v895
        %934 = vmatprep.subr.bf16.mxu0 0
        %935 = vmatpush1.bf16.msra.mxu0 %v894
        %936 = vmatprep.subr.bf16.mxu0 0
        %937 = vmatpush1.bf16.msra.mxu0 %v893
        %938 = vmatprep.subr.bf16.mxu0 0
        %939 = vmatpush1.bf16.msra.mxu0 %v892
        %940 = vmatprep.subr.bf16.mxu0 0
        %941 = vmatpush2.bf16.msra.mxu0 %v907
        %942 = vmatprep.subr.bf16.mxu0 0
        %943 = vmatpush2.bf16.msra.mxu0 %v906
        %944 = vmatprep.subr.bf16.mxu0 0
        %945 = vmatpush2.bf16.msra.mxu0 %v905
        %946 = vmatprep.subr.bf16.mxu0 0
        %947 = vmatpush2.bf16.msra.mxu0 %v904
        %948 = vmatprep.subr.bf16.mxu0 0
        %949 = vmatpush2.bf16.msra.mxu0 %v903
        %950 = vmatprep.subr.bf16.mxu0 0
        %951 = vmatpush2.bf16.msra.mxu0 %v902
        %952 = vmatprep.subr.bf16.mxu0 0
        %953 = vmatpush2.bf16.msra.mxu0 %v901
        %954 = vmatprep.subr.bf16.mxu0 0
        %955 = vmatpush2.bf16.msra.mxu0 %v900
        %956 = vmatprep.mubr.bf16.mxu0 %v758
        %957 = vmatmul.mubr.bf16.gmra.mxu0 %v757
        %v958 = vpop.f32.mrf.mxu0
        %v959 = vadd.f32 %v826, %v958
        %v960 = vpop.f32.mrf.mxu0
        %v961 = vpop.f32.mrf.mxu0
        %v962 = vadd.f32 %v826, %v961
        %v963 = vpop.f32.mrf.mxu0
        %964 = vmatprep.mubr.bf16.mxu0 %v760
        %965 = vmatmul.mubr.bf16.gmra.mxu0 %v759
        %v966 = vpop.f32.mrf.mxu0
        %v967 = vadd.f32 %v826, %v966
        %v968 = vpop.f32.mrf.mxu0
        %v969 = vpop.f32.mrf.mxu0
        %v970 = vadd.f32 %v826, %v969
        %v971 = vpop.f32.mrf.mxu0
        %972 = vmatprep.mubr.bf16.mxu0 %v762
        %973 = vmatmul.mubr.bf16.gmra.mxu0 %v761
        %v974 = vpop.f32.mrf.mxu0
        %v975 = vadd.f32 %v826, %v974
        %v976 = vpop.f32.mrf.mxu0
        %v977 = vpop.f32.mrf.mxu0
        %v978 = vadd.f32 %v826, %v977
        %v979 = vpop.f32.mrf.mxu0
        %980 = vmatprep.mubr.bf16.mxu0 %v764
        %981 = vmatmul.mubr.bf16.gmra.mxu0 %v763
        %v982 = vpop.f32.mrf.mxu0
        %v983 = vadd.f32 %v826, %v982
        %v984 = vpop.f32.mrf.mxu0
        %v985 = vpop.f32.mrf.mxu0
        %v986 = vadd.f32 %v826, %v985
        %v987 = vpop.f32.mrf.mxu0
        %988 = vmatprep.mubr.bf16.mxu0 %v766
        %989 = vmatmul.mubr.bf16.gmra.mxu0 %v765
        %v990 = vpop.f32.mrf.mxu0
        %v991 = vadd.f32 %v826, %v990
        %v992 = vpop.f32.mrf.mxu0
        %v993 = vpop.f32.mrf.mxu0
        %v994 = vadd.f32 %v826, %v993
        %v995 = vpop.f32.mrf.mxu0
        %996 = vmatprep.mubr.bf16.mxu0 %v768
        %997 = vmatmul.mubr.bf16.gmra.mxu0 %v767
        %v998 = vpop.f32.mrf.mxu0
        %v999 = vadd.f32 %v826, %v998
        %v1000 = vpop.f32.mrf.mxu0
        %v1001 = vpop.f32.mrf.mxu0
        %v1002 = vadd.f32 %v826, %v1001
        %v1003 = vpop.f32.mrf.mxu0
        %1004 = vmatprep.mubr.bf16.mxu0 %v770
        %1005 = vmatmul.mubr.bf16.gmra.mxu0 %v769
        %v1006 = vpop.f32.mrf.mxu0
        %v1007 = vadd.f32 %v826, %v1006
        %v1008 = vpop.f32.mrf.mxu0
        %v1009 = vpop.f32.mrf.mxu0
        %v1010 = vadd.f32 %v826, %v1009
        %v1011 = vpop.f32.mrf.mxu0
        %1012 = vmatprep.mubr.bf16.mxu0 %v772
        %1013 = vmatmul.mubr.bf16.gmra.mxu0 %v771
        %v1014 = vpop.f32.mrf.mxu0
        %v1015 = vadd.f32 %v826, %v1014
        %v1016 = vpop.f32.mrf.mxu0
        %v1017 = vpop.f32.mrf.mxu0
        %v1018 = vadd.f32 %v826, %v1017
        %v1019 = vpop.f32.mrf.mxu0
        %1020 = vmatprep.mubr.bf16.mxu0 %v774
        %1021 = vmatmul.mubr.bf16.gmra.mxu0 %v773
        %v1022 = vpop.f32.mrf.mxu0
        %v1023 = vadd.f32 %v826, %v1022
        %v1024 = vpop.f32.mrf.mxu0
        %v1025 = vpop.f32.mrf.mxu0
        %v1026 = vadd.f32 %v826, %v1025
        %v1027 = vpop.f32.mrf.mxu0
        %1028 = vmatprep.mubr.bf16.mxu0 %v776
        %1029 = vmatmul.mubr.bf16.gmra.mxu0 %v775
        %v1030 = vpop.f32.mrf.mxu0
        %v1031 = vadd.f32 %v826, %v1030
        %v1032 = vpop.f32.mrf.mxu0
        %v1033 = vpop.f32.mrf.mxu0
        %v1034 = vadd.f32 %v826, %v1033
        %v1035 = vpop.f32.mrf.mxu0
        %1036 = vmatprep.mubr.bf16.mxu0 %v778
        %1037 = vmatmul.mubr.bf16.gmra.mxu0 %v777
        %v1038 = vpop.f32.mrf.mxu0
        %v1039 = vadd.f32 %v826, %v1038
        %v1040 = vpop.f32.mrf.mxu0
        %v1041 = vpop.f32.mrf.mxu0
        %v1042 = vadd.f32 %v826, %v1041
        %v1043 = vpop.f32.mrf.mxu0
        %1044 = vmatprep.mubr.bf16.mxu0 %v780
        %1045 = vmatmul.mubr.bf16.gmra.mxu0 %v779
        %v1046 = vpop.f32.mrf.mxu0
        %v1047 = vadd.f32 %v826, %v1046
        %v1048 = vpop.f32.mrf.mxu0
        %v1049 = vpop.f32.mrf.mxu0
        %v1050 = vadd.f32 %v826, %v1049
        %v1051 = vpop.f32.mrf.mxu0
        %1052 = vmatprep.mubr.bf16.mxu0 %v782
        %1053 = vmatmul.mubr.bf16.gmra.mxu0 %v781
        %v1054 = vpop.f32.mrf.mxu0
        %v1055 = vadd.f32 %v826, %v1054
        %v1056 = vpop.f32.mrf.mxu0
        %v1057 = vpop.f32.mrf.mxu0
        %v1058 = vadd.f32 %v826, %v1057
        %v1059 = vpop.f32.mrf.mxu0
        %1060 = vmatprep.mubr.bf16.mxu0 %v784
        %1061 = vmatmul.mubr.bf16.gmra.mxu0 %v783
        %v1062 = vpop.f32.mrf.mxu0
        %v1063 = vadd.f32 %v826, %v1062
        %v1064 = vpop.f32.mrf.mxu0
        %v1065 = vpop.f32.mrf.mxu0
        %v1066 = vadd.f32 %v826, %v1065
        %v1067 = vpop.f32.mrf.mxu0
        %1068 = vmatprep.mubr.bf16.mxu0 %v786
        %1069 = vmatmul.mubr.bf16.gmra.mxu0 %v785
        %v1070 = vpop.f32.mrf.mxu0
        %v1071 = vadd.f32 %v826, %v1070
        %v1072 = vpop.f32.mrf.mxu0
        %v1073 = vpop.f32.mrf.mxu0
        %v1074 = vadd.f32 %v826, %v1073
        %v1075 = vpop.f32.mrf.mxu0
        %1076 = vmatprep.mubr.bf16.mxu0 %v788
        %1077 = vmatmul.mubr.bf16.gmra.mxu0 %v787
        %v1078 = vpop.f32.mrf.mxu0
        %v1079 = vadd.f32 %v826, %v1078
        %v1080 = vpop.f32.mrf.mxu0
        %v1081 = vpop.f32.mrf.mxu0
        %v1082 = vadd.f32 %v826, %v1081
        %v1083 = vpop.f32.mrf.mxu0
        %1084 = vdwg.mxu0
        %v1085 = vmax.f32 %v959, 0.0
        %v1086 = vmax.f32 %v962, 0.0
        %v1087 = vmax.f32 %v967, 0.0
        %v1088 = vmax.f32 %v970, 0.0
        %v1089 = vmax.f32 %v975, 0.0
        %v1090 = vmax.f32 %v978, 0.0
        %v1091 = vmax.f32 %v983, 0.0
        %v1092 = vmax.f32 %v986, 0.0
        %v1093 = vmax.f32 %v991, 0.0
        %v1094 = vmax.f32 %v994, 0.0
        %v1095 = vmax.f32 %v999, 0.0
        %v1096 = vmax.f32 %v1002, 0.0
        %v1097 = vmax.f32 %v1007, 0.0
        %v1098 = vmax.f32 %v1010, 0.0
        %v1099 = vmax.f32 %v1015, 0.0
        %v1100 = vmax.f32 %v1018, 0.0
        %v1101 = vmax.f32 %v1023, 0.0
        %v1102 = vmax.f32 %v1026, 0.0
        %v1103 = vmax.f32 %v1031, 0.0
        %v1104 = vmax.f32 %v1034, 0.0
        %v1105 = vmax.f32 %v1039, 0.0
        %v1106 = vmax.f32 %v1042, 0.0
        %v1107 = vmax.f32 %v1047, 0.0
        %v1108 = vmax.f32 %v1050, 0.0
        %v1109 = vmax.f32 %v1055, 0.0
        %v1110 = vmax.f32 %v1058, 0.0
        %v1111 = vmax.f32 %v1063, 0.0
        %v1112 = vmax.f32 %v1066, 0.0
        %v1113 = vmax.f32 %v1071, 0.0
        %v1114 = vmax.f32 %v1074, 0.0
        %v1115 = vmax.f32 %v1079, 0.0
        %v1116 = vmax.f32 %v1082, 0.0
        %v1117 = vpack.c.bf16 %v1086, %v1085
        %v1118 = vpack.c.bf16 %v1088, %v1087
        %v1119 = vpack.c.bf16 %v1090, %v1089
        %v1120 = vpack.c.bf16 %v1092, %v1091
        %v1121 = vpack.c.bf16 %v1094, %v1093
        %v1122 = vpack.c.bf16 %v1096, %v1095
        %v1123 = vpack.c.bf16 %v1098, %v1097
        %v1124 = vpack.c.bf16 %v1100, %v1099
        %v1125 = vpack.c.bf16 %v1102, %v1101
        %v1126 = vpack.c.bf16 %v1104, %v1103
        %v1127 = vpack.c.bf16 %v1106, %v1105
        %v1128 = vpack.c.bf16 %v1108, %v1107
        %v1129 = vpack.c.bf16 %v1110, %v1109
        %v1130 = vpack.c.bf16 %v1112, %v1111
        %v1131 = vpack.c.bf16 %v1114, %v1113
        %v1132 = vpack.c.bf16 %v1116, %v1115
        %v1133 = vld [vmem:[#allocation8] sm:$0xff]
        %v1134 = vld [vmem:[#allocation8 + $0x8] sm:$0xff]
        %v1135 = vld [vmem:[#allocation8 + $0x10] sm:$0xff]
        %v1136 = vld [vmem:[#allocation8 + $0x18] sm:$0xff]
        %v1137 = vld [vmem:[#allocation8 + $0x20] sm:$0xff]
        %v1138 = vld [vmem:[#allocation8 + $0x28] sm:$0xff]
        %v1139 = vld [vmem:[#allocation8 + $0x30] sm:$0xff]
        %v1140 = vld [vmem:[#allocation8 + $0x38] sm:$0xff]
        %v1141 = vld [vmem:[#allocation8 + $0x40] sm:$0xff]
        %v1142 = vld [vmem:[#allocation8 + $0x48] sm:$0xff]
        %v1143 = vld [vmem:[#allocation8 + $0x50] sm:$0xff]
        %v1144 = vld [vmem:[#allocation8 + $0x58] sm:$0xff]
        %v1145 = vld [vmem:[#allocation8 + $0x60] sm:$0xff]
        %v1146 = vld [vmem:[#allocation8 + $0x68] sm:$0xff]
        %v1147 = vld [vmem:[#allocation8 + $0x70] sm:$0xff]
        %v1148 = vld [vmem:[#allocation8 + $0x78] sm:$0xff]
        %v1149 = vld [vmem:[%s6] sm:$0x3]
        %v1151 = vlaneseq
        %v1152 = vshrl.u32 %v1151, 7
        %v1153 = vsub.s32 0, %v1152
        %v1154 = vrot.slane %v1149, %v1153
        %v1155 = vlaneseq
        %v1156 = vshrl.u32 %v1155, 7
        %v1157 = vsub.s32 1, %v1156
        %v1158 = vrot.slane %v1149, %v1157
        %v1177 = vunpack.c.l.b16 %v1133
        %v1178 = vunpack.c.h.b16 %v1133
        %v1179 = vunpack.c.l.b16 %v1134
        %v1180 = vunpack.c.h.b16 %v1134
        %v1181 = vunpack.c.l.b16 %v1135
        %v1182 = vunpack.c.h.b16 %v1135
        %v1183 = vunpack.c.l.b16 %v1136
        %v1184 = vunpack.c.h.b16 %v1136
        %v1185 = vunpack.c.l.b16 %v1137
        %v1186 = vunpack.c.h.b16 %v1137
        %v1187 = vunpack.c.l.b16 %v1138
        %v1188 = vunpack.c.h.b16 %v1138
        %v1189 = vunpack.c.l.b16 %v1139
        %v1190 = vunpack.c.h.b16 %v1139
        %v1191 = vunpack.c.l.b16 %v1140
        %v1192 = vunpack.c.h.b16 %v1140
        %v1193 = vunpack.c.l.b16 %v1141
        %v1194 = vunpack.c.h.b16 %v1141
        %v1195 = vunpack.c.l.b16 %v1142
        %v1196 = vunpack.c.h.b16 %v1142
        %v1197 = vunpack.c.l.b16 %v1143
        %v1198 = vunpack.c.h.b16 %v1143
        %v1199 = vunpack.c.l.b16 %v1144
        %v1200 = vunpack.c.h.b16 %v1144
        %v1201 = vunpack.c.l.b16 %v1145
        %v1202 = vunpack.c.h.b16 %v1145
        %v1203 = vunpack.c.l.b16 %v1146
        %v1204 = vunpack.c.h.b16 %v1146
        %v1205 = vunpack.c.l.b16 %v1147
        %v1206 = vunpack.c.h.b16 %v1147
        %v1207 = vunpack.c.l.b16 %v1148
        %v1208 = vunpack.c.h.b16 %v1148
        %v1209 = vpack.c.b16 %v1179, %v1177
        %v1210 = vpack.c.b16 %v1180, %v1178
        %v1211 = vpack.c.b16 %v1183, %v1181
        %v1212 = vpack.c.b16 %v1184, %v1182
        %v1213 = vpack.c.b16 %v1187, %v1185
        %v1214 = vpack.c.b16 %v1188, %v1186
        %v1215 = vpack.c.b16 %v1191, %v1189
        %v1216 = vpack.c.b16 %v1192, %v1190
        %v1217 = vpack.c.b16 %v1195, %v1193
        %v1218 = vpack.c.b16 %v1196, %v1194
        %v1219 = vpack.c.b16 %v1199, %v1197
        %v1220 = vpack.c.b16 %v1200, %v1198
        %v1221 = vpack.c.b16 %v1203, %v1201
        %v1222 = vpack.c.b16 %v1204, %v1202
        %v1223 = vpack.c.b16 %v1207, %v1205
        %v1224 = vpack.c.b16 %v1208, %v1206
        %1241 = vmatprep.subr.bf16.mxu0 %v1224
        %1242 = vmatpush1.bf16.msra.mxu0 %v1223
        %1243 = vmatprep.subr.bf16.mxu0 %v1222
        %1244 = vmatpush1.bf16.msra.mxu0 %v1221
        %1245 = vmatprep.subr.bf16.mxu0 %v1220
        %1246 = vmatpush1.bf16.msra.mxu0 %v1219
        %1247 = vmatprep.subr.bf16.mxu0 %v1218
        %1248 = vmatpush1.bf16.msra.mxu0 %v1217
        %1249 = vmatprep.subr.bf16.mxu0 %v1216
        %1250 = vmatpush1.bf16.msra.mxu0 %v1215
        %1251 = vmatprep.subr.bf16.mxu0 %v1214
        %1252 = vmatpush1.bf16.msra.mxu0 %v1213
        %1253 = vmatprep.subr.bf16.mxu0 %v1212
        %1254 = vmatpush1.bf16.msra.mxu0 %v1211
        %1255 = vmatprep.subr.bf16.mxu0 %v1210
        %1256 = vmatpush1.bf16.msra.mxu0 %v1209
        %1257 = vmatprep.subr.bf16.mxu0 0
        %1258 = vmatpush2.bf16.msra.mxu0 0
        %1259 = vmatprep.subr.bf16.mxu0 0
        %1260 = vmatpush2.bf16.msra.mxu0 0
        %1261 = vmatprep.subr.bf16.mxu0 0
        %1262 = vmatpush2.bf16.msra.mxu0 0
        %1263 = vmatprep.subr.bf16.mxu0 0
        %1264 = vmatpush2.bf16.msra.mxu0 0
        %1265 = vmatprep.subr.bf16.mxu0 0
        %1266 = vmatpush2.bf16.msra.mxu0 0
        %1267 = vmatprep.subr.bf16.mxu0 0
        %1268 = vmatpush2.bf16.msra.mxu0 0
        %1269 = vmatprep.subr.bf16.mxu0 0
        %1270 = vmatpush2.bf16.msra.mxu0 0
        %1271 = vmatprep.subr.bf16.mxu0 0
        %1272 = vmatpush2.bf16.msra.mxu0 0
        %1273 = vmatprep.mubr.bf16.mxu0 0
        %1274 = vmatmul.mubr.bf16.gmra.mxu0 %v1117
        %v1275 = vpop.f32.mrf.mxu0
        %v1276 = vadd.f32 %v1154, %v1275
        %v1277 = vpop.f32.mrf.mxu0
        %v1278 = vadd.f32 %v1158, %v1277
        %v1279 = vpop.f32.mrf.mxu0
        %v1280 = vadd.f32 %v1154, %v1279
        %v1281 = vpop.f32.mrf.mxu0
        %v1282 = vadd.f32 %v1158, %v1281
        %1283 = vmatprep.mubr.bf16.mxu0 0
        %1284 = vmatmul.mubr.bf16.gmra.mxu0 %v1118
        %v1285 = vpop.f32.mrf.mxu0
        %v1286 = vadd.f32 %v1154, %v1285
        %v1287 = vpop.f32.mrf.mxu0
        %v1288 = vadd.f32 %v1158, %v1287
        %v1289 = vpop.f32.mrf.mxu0
        %v1290 = vadd.f32 %v1154, %v1289
        %v1291 = vpop.f32.mrf.mxu0
        %v1292 = vadd.f32 %v1158, %v1291
        %1293 = vmatprep.mubr.bf16.mxu0 0
        %1294 = vmatmul.mubr.bf16.gmra.mxu0 %v1119
        %v1295 = vpop.f32.mrf.mxu0
        %v1296 = vadd.f32 %v1154, %v1295
        %v1297 = vpop.f32.mrf.mxu0
        %v1298 = vadd.f32 %v1158, %v1297
        %v1299 = vpop.f32.mrf.mxu0
        %v1300 = vadd.f32 %v1154, %v1299
        %v1301 = vpop.f32.mrf.mxu0
        %v1302 = vadd.f32 %v1158, %v1301
        %1303 = vmatprep.mubr.bf16.mxu0 0
        %1304 = vmatmul.mubr.bf16.gmra.mxu0 %v1120
        %v1305 = vpop.f32.mrf.mxu0
        %v1306 = vadd.f32 %v1154, %v1305
        %v1307 = vpop.f32.mrf.mxu0
        %v1308 = vadd.f32 %v1158, %v1307
        %v1309 = vpop.f32.mrf.mxu0
        %v1310 = vadd.f32 %v1154, %v1309
        %v1311 = vpop.f32.mrf.mxu0
        %v1312 = vadd.f32 %v1158, %v1311
        %1313 = vmatprep.mubr.bf16.mxu0 0
        %1314 = vmatmul.mubr.bf16.gmra.mxu0 %v1121
        %v1315 = vpop.f32.mrf.mxu0
        %v1316 = vadd.f32 %v1154, %v1315
        %v1317 = vpop.f32.mrf.mxu0
        %v1318 = vadd.f32 %v1158, %v1317
        %v1319 = vpop.f32.mrf.mxu0
        %v1320 = vadd.f32 %v1154, %v1319
        %v1321 = vpop.f32.mrf.mxu0
        %v1322 = vadd.f32 %v1158, %v1321
        %1323 = vmatprep.mubr.bf16.mxu0 0
        %1324 = vmatmul.mubr.bf16.gmra.mxu0 %v1122
        %v1325 = vpop.f32.mrf.mxu0
        %v1326 = vadd.f32 %v1154, %v1325
        %v1327 = vpop.f32.mrf.mxu0
        %v1328 = vadd.f32 %v1158, %v1327
        %v1329 = vpop.f32.mrf.mxu0
        %v1330 = vadd.f32 %v1154, %v1329
        %v1331 = vpop.f32.mrf.mxu0
        %v1332 = vadd.f32 %v1158, %v1331
        %1333 = vmatprep.mubr.bf16.mxu0 0
        %1334 = vmatmul.mubr.bf16.gmra.mxu0 %v1123
        %v1335 = vpop.f32.mrf.mxu0
        %v1336 = vadd.f32 %v1154, %v1335
        %v1337 = vpop.f32.mrf.mxu0
        %v1338 = vadd.f32 %v1158, %v1337
        %v1339 = vpop.f32.mrf.mxu0
        %v1340 = vadd.f32 %v1154, %v1339
        %v1341 = vpop.f32.mrf.mxu0
        %v1342 = vadd.f32 %v1158, %v1341
        %1343 = vmatprep.mubr.bf16.mxu0 0
        %1344 = vmatmul.mubr.bf16.gmra.mxu0 %v1124
        %v1345 = vpop.f32.mrf.mxu0
        %v1346 = vadd.f32 %v1154, %v1345
        %v1347 = vpop.f32.mrf.mxu0
        %v1348 = vadd.f32 %v1158, %v1347
        %v1349 = vpop.f32.mrf.mxu0
        %v1350 = vadd.f32 %v1154, %v1349
        %v1351 = vpop.f32.mrf.mxu0
        %v1352 = vadd.f32 %v1158, %v1351
        %1353 = vmatprep.mubr.bf16.mxu0 0
        %1354 = vmatmul.mubr.bf16.gmra.mxu0 %v1125
        %v1355 = vpop.f32.mrf.mxu0
        %v1356 = vadd.f32 %v1154, %v1355
        %v1357 = vpop.f32.mrf.mxu0
        %v1358 = vadd.f32 %v1158, %v1357
        %v1359 = vpop.f32.mrf.mxu0
        %v1360 = vadd.f32 %v1154, %v1359
        %v1361 = vpop.f32.mrf.mxu0
        %v1362 = vadd.f32 %v1158, %v1361
        %1363 = vmatprep.mubr.bf16.mxu0 0
        %1364 = vmatmul.mubr.bf16.gmra.mxu0 %v1126
        %v1365 = vpop.f32.mrf.mxu0
        %v1366 = vadd.f32 %v1154, %v1365
        %v1367 = vpop.f32.mrf.mxu0
        %v1368 = vadd.f32 %v1158, %v1367
        %v1369 = vpop.f32.mrf.mxu0
        %v1370 = vadd.f32 %v1154, %v1369
        %v1371 = vpop.f32.mrf.mxu0
        %v1372 = vadd.f32 %v1158, %v1371
        %1373 = vmatprep.mubr.bf16.mxu0 0
        %1374 = vmatmul.mubr.bf16.gmra.mxu0 %v1127
        %v1375 = vpop.f32.mrf.mxu0
        %v1376 = vadd.f32 %v1154, %v1375
        %v1377 = vpop.f32.mrf.mxu0
        %v1378 = vadd.f32 %v1158, %v1377
        %v1379 = vpop.f32.mrf.mxu0
        %v1380 = vadd.f32 %v1154, %v1379
        %v1381 = vpop.f32.mrf.mxu0
        %v1382 = vadd.f32 %v1158, %v1381
        %1383 = vmatprep.mubr.bf16.mxu0 0
        %1384 = vmatmul.mubr.bf16.gmra.mxu0 %v1128
        %v1385 = vpop.f32.mrf.mxu0
        %v1386 = vadd.f32 %v1154, %v1385
        %v1387 = vpop.f32.mrf.mxu0
        %v1388 = vadd.f32 %v1158, %v1387
        %v1389 = vpop.f32.mrf.mxu0
        %v1390 = vadd.f32 %v1154, %v1389
        %v1391 = vpop.f32.mrf.mxu0
        %v1392 = vadd.f32 %v1158, %v1391
        %1393 = vmatprep.mubr.bf16.mxu0 0
        %1394 = vmatmul.mubr.bf16.gmra.mxu0 %v1129
        %v1395 = vpop.f32.mrf.mxu0
        %v1396 = vadd.f32 %v1154, %v1395
        %v1397 = vpop.f32.mrf.mxu0
        %v1398 = vadd.f32 %v1158, %v1397
        %v1399 = vpop.f32.mrf.mxu0
        %v1400 = vadd.f32 %v1154, %v1399
        %v1401 = vpop.f32.mrf.mxu0
        %v1402 = vadd.f32 %v1158, %v1401
        %1403 = vmatprep.mubr.bf16.mxu0 0
        %1404 = vmatmul.mubr.bf16.gmra.mxu0 %v1130
        %v1405 = vpop.f32.mrf.mxu0
        %v1406 = vadd.f32 %v1154, %v1405
        %v1407 = vpop.f32.mrf.mxu0
        %v1408 = vadd.f32 %v1158, %v1407
        %v1409 = vpop.f32.mrf.mxu0
        %v1410 = vadd.f32 %v1154, %v1409
        %v1411 = vpop.f32.mrf.mxu0
        %v1412 = vadd.f32 %v1158, %v1411
        %1413 = vmatprep.mubr.bf16.mxu0 0
        %1414 = vmatmul.mubr.bf16.gmra.mxu0 %v1131
        %v1415 = vpop.f32.mrf.mxu0
        %v1416 = vadd.f32 %v1154, %v1415
        %v1417 = vpop.f32.mrf.mxu0
        %v1418 = vadd.f32 %v1158, %v1417
        %v1419 = vpop.f32.mrf.mxu0
        %v1420 = vadd.f32 %v1154, %v1419
        %v1421 = vpop.f32.mrf.mxu0
        %v1422 = vadd.f32 %v1158, %v1421
        %1423 = vmatprep.mubr.bf16.mxu0 0
        %1424 = vmatmul.mubr.bf16.gmra.mxu0 %v1132
        %v1425 = vpop.f32.mrf.mxu0
        %v1426 = vadd.f32 %v1154, %v1425
        %v1427 = vpop.f32.mrf.mxu0
        %v1428 = vadd.f32 %v1158, %v1427
        %v1429 = vpop.f32.mrf.mxu0
        %v1430 = vadd.f32 %v1154, %v1429
        %v1431 = vpop.f32.mrf.mxu0
        %v1432 = vadd.f32 %v1158, %v1431
        %1433 = vdwg.mxu0
        %v1434 = vmax.f32 %v1276, 0.0
        %v1435 = vmax.f32 %v1278, 0.0
        %v1436 = vmax.f32 %v1280, 0.0
        %v1437 = vmax.f32 %v1282, 0.0
        %v1438 = vmax.f32 %v1286, 0.0
        %v1439 = vmax.f32 %v1288, 0.0
        %v1440 = vmax.f32 %v1290, 0.0
        %v1441 = vmax.f32 %v1292, 0.0
        %v1442 = vmax.f32 %v1296, 0.0
        %v1443 = vmax.f32 %v1298, 0.0
        %v1444 = vmax.f32 %v1300, 0.0
        %v1445 = vmax.f32 %v1302, 0.0
        %v1446 = vmax.f32 %v1306, 0.0
        %v1447 = vmax.f32 %v1308, 0.0
        %v1448 = vmax.f32 %v1310, 0.0
        %v1449 = vmax.f32 %v1312, 0.0
        %v1450 = vmax.f32 %v1316, 0.0
        %v1451 = vmax.f32 %v1318, 0.0
        %v1452 = vmax.f32 %v1320, 0.0
        %v1453 = vmax.f32 %v1322, 0.0
        %v1454 = vmax.f32 %v1326, 0.0
        %v1455 = vmax.f32 %v1328, 0.0
        %v1456 = vmax.f32 %v1330, 0.0
        %v1457 = vmax.f32 %v1332, 0.0
        %v1458 = vmax.f32 %v1336, 0.0
        %v1459 = vmax.f32 %v1338, 0.0
        %v1460 = vmax.f32 %v1340, 0.0
        %v1461 = vmax.f32 %v1342, 0.0
        %v1462 = vmax.f32 %v1346, 0.0
        %v1463 = vmax.f32 %v1348, 0.0
        %v1464 = vmax.f32 %v1350, 0.0
        %v1465 = vmax.f32 %v1352, 0.0
        %v1466 = vmax.f32 %v1356, 0.0
        %v1467 = vmax.f32 %v1358, 0.0
        %v1468 = vmax.f32 %v1360, 0.0
        %v1469 = vmax.f32 %v1362, 0.0
        %v1470 = vmax.f32 %v1366, 0.0
        %v1471 = vmax.f32 %v1368, 0.0
        %v1472 = vmax.f32 %v1370, 0.0
        %v1473 = vmax.f32 %v1372, 0.0
        %v1474 = vmax.f32 %v1376, 0.0
        %v1475 = vmax.f32 %v1378, 0.0
        %v1476 = vmax.f32 %v1380, 0.0
        %v1477 = vmax.f32 %v1382, 0.0
        %v1478 = vmax.f32 %v1386, 0.0
        %v1479 = vmax.f32 %v1388, 0.0
        %v1480 = vmax.f32 %v1390, 0.0
        %v1481 = vmax.f32 %v1392, 0.0
        %v1482 = vmax.f32 %v1396, 0.0
        %v1483 = vmax.f32 %v1398, 0.0
        %v1484 = vmax.f32 %v1400, 0.0
        %v1485 = vmax.f32 %v1402, 0.0
        %v1486 = vmax.f32 %v1406, 0.0
        %v1487 = vmax.f32 %v1408, 0.0
        %v1488 = vmax.f32 %v1410, 0.0
        %v1489 = vmax.f32 %v1412, 0.0
        %v1490 = vmax.f32 %v1416, 0.0
        %v1491 = vmax.f32 %v1418, 0.0
        %v1492 = vmax.f32 %v1420, 0.0
        %v1493 = vmax.f32 %v1422, 0.0
        %v1494 = vmax.f32 %v1426, 0.0
        %v1495 = vmax.f32 %v1428, 0.0
        %v1496 = vmax.f32 %v1430, 0.0
        %v1497 = vmax.f32 %v1432, 0.0
        %1498 = vst [vmem:[%s340] sm:$0xff] %v1434
        %1499 = vst [vmem:[%s340 + $0x8] sm:$0xff] %v1435
        %1500 = vst [vmem:[%s340 + $0x10] sm:$0xff] %v1436
        %1501 = vst [vmem:[%s340 + $0x18] sm:$0xff] %v1437
        %1502 = vst [vmem:[%s340 + $0x20] sm:$0xff] %v1438
        %1503 = vst [vmem:[%s340 + $0x28] sm:$0xff] %v1439
        %1504 = vst [vmem:[%s340 + $0x30] sm:$0xff] %v1440
        %1505 = vst [vmem:[%s340 + $0x38] sm:$0xff] %v1441
        %1506 = vst [vmem:[%s340 + $0x40] sm:$0xff] %v1442
        %1507 = vst [vmem:[%s340 + $0x48] sm:$0xff] %v1443
        %1508 = vst [vmem:[%s340 + $0x50] sm:$0xff] %v1444
        %1509 = vst [vmem:[%s340 + $0x58] sm:$0xff] %v1445
        %1510 = vst [vmem:[%s340 + $0x60] sm:$0xff] %v1446
        %1511 = vst [vmem:[%s340 + $0x68] sm:$0xff] %v1447
        %1512 = vst [vmem:[%s340 + $0x70] sm:$0xff] %v1448
        %1513 = vst [vmem:[%s340 + $0x78] sm:$0xff] %v1449
        %1514 = vst [vmem:[%s340 + $0x80] sm:$0xff] %v1450
        %1515 = vst [vmem:[%s340 + $0x88] sm:$0xff] %v1451
        %1516 = vst [vmem:[%s340 + $0x90] sm:$0xff] %v1452
        %1517 = vst [vmem:[%s340 + $0x98] sm:$0xff] %v1453
        %1518 = vst [vmem:[%s340 + $0xa0] sm:$0xff] %v1454
        %1519 = vst [vmem:[%s340 + $0xa8] sm:$0xff] %v1455
        %1520 = vst [vmem:[%s340 + $0xb0] sm:$0xff] %v1456
        %1521 = vst [vmem:[%s340 + $0xb8] sm:$0xff] %v1457
        %1522 = vst [vmem:[%s340 + $0xc0] sm:$0xff] %v1458
        %1523 = vst [vmem:[%s340 + $0xc8] sm:$0xff] %v1459
        %1524 = vst [vmem:[%s340 + $0xd0] sm:$0xff] %v1460
        %1525 = vst [vmem:[%s340 + $0xd8] sm:$0xff] %v1461
        %1526 = vst [vmem:[%s340 + $0xe0] sm:$0xff] %v1462
        %1527 = vst [vmem:[%s340 + $0xe8] sm:$0xff] %v1463
        %1528 = vst [vmem:[%s340 + $0xf0] sm:$0xff] %v1464
        %1529 = vst [vmem:[%s340 + $0xf8] sm:$0xff] %v1465
        %1530 = vst [vmem:[%s340 + $0x100] sm:$0xff] %v1466
        %1531 = vst [vmem:[%s340 + $0x108] sm:$0xff] %v1467
        %1532 = vst [vmem:[%s340 + $0x110] sm:$0xff] %v1468
        %1533 = vst [vmem:[%s340 + $0x118] sm:$0xff] %v1469
        %1534 = vst [vmem:[%s340 + $0x120] sm:$0xff] %v1470
        %1535 = vst [vmem:[%s340 + $0x128] sm:$0xff] %v1471
        %1536 = vst [vmem:[%s340 + $0x130] sm:$0xff] %v1472
        %1537 = vst [vmem:[%s340 + $0x138] sm:$0xff] %v1473
        %1538 = vst [vmem:[%s340 + $0x140] sm:$0xff] %v1474
        %1539 = vst [vmem:[%s340 + $0x148] sm:$0xff] %v1475
        %1540 = vst [vmem:[%s340 + $0x150] sm:$0xff] %v1476
        %1541 = vst [vmem:[%s340 + $0x158] sm:$0xff] %v1477
        %1542 = vst [vmem:[%s340 + $0x160] sm:$0xff] %v1478
        %1543 = vst [vmem:[%s340 + $0x168] sm:$0xff] %v1479
        %1544 = vst [vmem:[%s340 + $0x170] sm:$0xff] %v1480
        %1545 = vst [vmem:[%s340 + $0x178] sm:$0xff] %v1481
        %1546 = vst [vmem:[%s340 + $0x180] sm:$0xff] %v1482
        %1547 = vst [vmem:[%s340 + $0x188] sm:$0xff] %v1483
        %1548 = vst [vmem:[%s340 + $0x190] sm:$0xff] %v1484
        %1549 = vst [vmem:[%s340 + $0x198] sm:$0xff] %v1485
        %1550 = vst [vmem:[%s340 + $0x1a0] sm:$0xff] %v1486
        %1551 = vst [vmem:[%s340 + $0x1a8] sm:$0xff] %v1487
        %1552 = vst [vmem:[%s340 + $0x1b0] sm:$0xff] %v1488
        %1553 = vst [vmem:[%s340 + $0x1b8] sm:$0xff] %v1489
        %1554 = vst [vmem:[%s340 + $0x1c0] sm:$0xff] %v1490
        %1555 = vst [vmem:[%s340 + $0x1c8] sm:$0xff] %v1491
        %1556 = vst [vmem:[%s340 + $0x1d0] sm:$0xff] %v1492
        %1557 = vst [vmem:[%s340 + $0x1d8] sm:$0xff] %v1493
        %1558 = vst [vmem:[%s340 + $0x1e0] sm:$0xff] %v1494
        %1559 = vst [vmem:[%s340 + $0x1e8] sm:$0xff] %v1495
        %1560 = vst [vmem:[%s340 + $0x1f0] sm:$0xff] %v1496
        %1561 = vst [vmem:[%s340 + $0x1f8] sm:$0xff] %v1497
        %s1562 = sand.u32 %s186, 1
        %s1563 = scalar_lea.sflag [#allocation4], %s1562
        %s1564 = sand.u32 %s186, 1
        %s1565 = smul.addr %s1564, 512
        %s1566 = scalar_lea.vmem [#allocation10], %s1565
        // Predicated region
        $region65: #{tpu_custom_call.1} parent=47 // pred_check
          %p1567 = pneg %p196
        $region66: #{tpu_custom_call.1} parent=47 // pred_check_branch
          %1569 = sbr.rel (%p1567) target = $region68
        $region67: #{tpu_custom_call.1} parent=47 // pred_region
          %s1570 = smul.u32 32, %s26
          %s1572 = ssub.s32 8192, 8192
          %1573 = vsyncadd %s1563, %s1572
          %s1574 = smul.addr %s1570, 2
          %s1575 = smul.addr %s1574, 128
          %s1576 = scalar_lea.hbm %s7, %s1575
          %s1577 = sshll.u32 %s1566, 4
          %s1578 = int_to_ptr.vmem [resolvable:$true] %s1577
          %1583 = dma.vmem_to_hbm [thread:$0]  %s1578, 8192, %s1576, %s1563, 256, 256, 16
        $region68: #{tpu_custom_call.1} parent=47 // pred_fallthru
          _
      $region48: #{tpu_custom_call.1} parent=5 // pred_fallthru
        _
      %p1584 = scmp.le.s32.totalorder 2, %s21
      // Predicated region
      $region69: #{tpu_custom_call.1} parent=5 // pred_check
        %p1585 = pneg %p1584
      $region70: #{tpu_custom_call.1} parent=5 // pred_check_branch
        %1587 = sbr.rel (%p1585) target = $region72
      $region71: #{tpu_custom_call.1} parent=5 // pred_region
        %s1588 = ssub.s32 %s21, 2
        // Predicated region
        $region73: #{tpu_custom_call.1} parent=71 // pred_check
          %p1589 = pneg %p202
        $region74: #{tpu_custom_call.1} parent=71 // pred_check_branch
          %1591 = sbr.rel (%p1589) target = $region76
        $region75: #{tpu_custom_call.1} parent=71 // pred_region
          %s1592 = sand.u32 %s187, 1
          %s1593 = scalar_lea.sflag [#allocation4], %s1592
          %s1594 = sand.u32 %s187, 1
          %s1595 = smul.addr %s1594, 512
          %s1596 = scalar_lea.vmem [#allocation10], %s1595
          %1597 = dma.done %s1593, 8192
        $region76: #{tpu_custom_call.1} parent=71 // pred_fallthru
          _
      $region72: #{tpu_custom_call.1} parent=5 // pred_fallthru
        _
    $region6: #{tpu_custom_call.1} parent=1 // loop_footer
      %s25 = sadd.s32 1, %s21
    $region7: #{tpu_custom_call.1} parent=1 // loop_footer_branch
      %20 = sbr.rel target = $region3
    $region8: #{tpu_custom_call.1} parent=1 // loop_exit
      _
    %1598 = vsyncpa [#allocation3], 1
    %s1599 = scalar_lea.sflag [#allocation3], 1
    %1600 = vsyncpa %s1599, 1
    %1601 = vsyncpa [#allocation6], 1
    %1602 = vsyncpa [#allocation9], 1
    %1603 = vsyncpa [#allocation4], 1
    %s1604 = scalar_lea.sflag [#allocation4], 1
    %1605 = vsyncpa %s1604, 1

</llo_original>
